<compile_context>
chip_gen: v7x
topology: tpu7x:2x2x1
jax: 0.10.0
libtpu: 0.0.40
codegen_flags: <defaults>
</compile_context>

<pallas_src>
import functools

import jax
import jax.numpy as jnp
from jax.experimental import pallas as pl
from jax.experimental.pallas import tpu as pltpu


def decoder_kernel(z_ref, w1_ref, b1_ref, w2_ref, b2_ref, w3_ref, b3_ref, o_ref,
                   *, bf16_epilogue):
    # z_ref: (TB, latent_dim) bf16; weights bf16, biases f32, all resident in VMEM.
    z = z_ref[...]

    # Layer 1: bf16 matmul, f32 accumulate, f32 bias + relu.
    h1 = jnp.dot(z, w1_ref[...], preferred_element_type=jnp.float32) + b1_ref[...]
    h1 = jnp.maximum(h1, 0.0)

    # Layer 2.
    h2 = jnp.dot(h1.astype(jnp.bfloat16), w2_ref[...],
                 preferred_element_type=jnp.float32) + b2_ref[...]
    h2 = jnp.maximum(h2, 0.0)

    # Output layer.
    logits = jnp.dot(h2.astype(jnp.bfloat16), w3_ref[...],
                     preferred_element_type=jnp.float32) + b3_ref[...]

    # sigmoid(x) = 1 / (1 + exp(-x)); reciprocal on the EUP approx path.
    if bf16_epilogue:
        # v6e/v7x: bf16 EUP/VPU run the big exp over (TB, out_dim) at 2x packed rate.
        e = jnp.exp(-(logits.astype(jnp.bfloat16))).astype(jnp.float32)
    else:
        # v5e / unknown: no bf16 EUP, keep the native f32 path.
        e = jnp.exp(-logits)
    o_ref[...] = pl.reciprocal(1.0 + e, approx=True).astype(o_ref.dtype)


def _vmem_capacity_bytes():
    try:
        info = pltpu.get_tpu_info()
        cap = getattr(info, "vmem_capacity_bytes", None)
        if cap:
            return int(cap)
    except Exception:
        pass
    return 32 * 1024 * 1024  # conservative fallback (default scoped VMEM)


def _default_bf16_epilogue():
    """bf16 exp only on chips with a bf16 VPU/EUP (v6e and later)."""
    try:
        kind = jax.devices()[0].device_kind.lower()
    except Exception:
        return False
    for old in ("v2", "v3", "v4", "v5"):
        if old in kind:
            return False
    return ("v6" in kind) or ("v7" in kind)


def _auto_batch_tile(B, per_row_bytes, fixed_bytes, vmem_budget):
    """Largest batch tile that fits the VMEM budget; for large batches keep >=4
    grid steps so both v7x TensorCores stay pipelined under 'parallel' semantics."""
    step_cap = max(B // 4, 256)
    for tile in (4096, 2048, 1024, 512, 256, 128, 64, 32, 16, 8):
        if tile > step_cap or B % tile != 0:
            continue
        if fixed_bytes + tile * per_row_bytes <= vmem_budget:
            return tile
    return B  # full-batch single tile fallback


def _pad_cols(x, to):
    pad = to - x.shape[-1]
    if pad <= 0:
        return x
    return jnp.pad(x, [(0, 0)] * (x.ndim - 1) + [(0, pad)])


def decoder_forward(z, w1, b1, w2, b2, w3, b3, *,
                    batch_tile=None, out_dtype=jnp.bfloat16, bf16_epilogue=None):
    B0, latent_dim = z.shape
    h1_dim = w1.shape[1]
    h2_dim = w2.shape[1]
    out_dim = w3.shape[1]

    # ---- lane-dense padding (all zero columns/rows => identical math) ----
    h1_pad = max(128, ((h1_dim + 127) // 128) * 128)
    out_pad = ((out_dim + 127) // 128) * 128

    w1 = _pad_cols(w1, h1_pad)
    b1 = _pad_cols(b1.reshape(1, -1), h1_pad)
    w2 = jnp.pad(w2, ((0, h1_pad - h1_dim), (0, 0)))
    b2 = b2.reshape(1, -1)
    w3 = _pad_cols(w3, out_pad)
    b3 = _pad_cols(b3.reshape(1, -1), out_pad)

    # ---- pad batch to a multiple of 8 (sublane-dense blocks) ----
    B = ((B0 + 7) // 8) * 8
    if B != B0:
        z = jnp.pad(z, ((0, B - B0), (0, 0)))

    # ---- precision prep: bf16 matmul operands, f32 biases ----
    z_c = z.astype(jnp.bfloat16)
    w1_c = w1.astype(jnp.bfloat16)
    w2_c = w2.astype(jnp.bfloat16)
    w3_c = w3.astype(jnp.bfloat16)
    b1_c = b1.astype(jnp.float32)
    b2_c = b2.astype(jnp.float32)
    b3_c = b3.astype(jnp.float32)

    out_bytes = jnp.dtype(out_dtype).itemsize

    # ---- VMEM footprint model (double-buffered tiled arrays + f32 temporaries) ----
    per_row = (2 * latent_dim * 2                  # z bf16, 2 buffers
               + out_bytes * out_pad * 2           # output, 2 buffers
               + 4 * (h1_pad + h2_dim + 2 * out_pad))  # f32 h1/h2/logits temporaries
    fixed = 2 * (2 * (latent_dim * h1_pad + h1_pad * h2_dim + h2_dim * out_pad)
                 + 4 * (h1_pad + h2_dim + out_pad))    # resident weights/biases (x2 bufs)

    vmem_cap = _vmem_capacity_bytes()
    vmem_budget = int(vmem_cap * 0.6)

    if batch_tile is None:
        batch_tile = _auto_batch_tile(B, per_row, fixed, vmem_budget)
    assert B % batch_tile == 0, "padded batch must be divisible by batch_tile"
    grid = (B // batch_tile,)

    need = fixed + batch_tile * per_row
    vmem_limit = max(min(vmem_cap - (4 << 20), need + (8 << 20)), 16 << 20)

    if bf16_epilogue is None:
        bf16_epilogue = _default_bf16_epilogue()

    weight_bytes = 2 * (latent_dim * h1_pad + h1_pad * h2_dim + h2_dim * out_pad) \
        + 4 * (h1_pad + h2_dim + out_pad)
    cost = pl.CostEstimate(
        flops=2 * B * (latent_dim * h1_pad + h1_pad * h2_dim + h2_dim * out_pad),
        transcendentals=B * out_pad,
        bytes_accessed=B * (2 * latent_dim + out_bytes * out_pad) + weight_bytes,
    )

    kernel = functools.partial(decoder_kernel, bf16_epilogue=bf16_epilogue)

    out = pl.pallas_call(
        kernel,
        out_shape=jax.ShapeDtypeStruct((B, out_pad), out_dtype),
        grid_spec=pltpu.PrefetchScalarGridSpec(
            num_scalar_prefetch=0,
            grid=grid,
            in_specs=[
                pl.BlockSpec((batch_tile, latent_dim), lambda i: (i, 0)),  # z (batch tiled)
                pl.BlockSpec((latent_dim, h1_pad), lambda i: (0, 0)),      # w1 (resident)
                pl.BlockSpec((1, h1_pad), lambda i: (0, 0)),               # b1
                pl.BlockSpec((h1_pad, h2_dim), lambda i: (0, 0)),          # w2
                pl.BlockSpec((1, h2_dim), lambda i: (0, 0)),               # b2
                pl.BlockSpec((h2_dim, out_pad), lambda i: (0, 0)),         # w3
                pl.BlockSpec((1, out_pad), lambda i: (0, 0)),              # b3
            ],
            out_specs=pl.BlockSpec((batch_tile, out_pad), lambda i: (i, 0)),
        ),
        compiler_params=pltpu.CompilerParams(
            dimension_semantics=("parallel",),     # batch axis shards across v7x's 2 TCs
            vmem_limit_bytes=int(vmem_limit),
        ),
        cost_estimate=cost,
    )(z_c, w1_c, b1_c, w2_c, b2_c, w3_c, b3_c)

    # Slice off batch / output-feature padding outside the kernel.
    return out[:B0, :out_dim]


def reference_forward(z, w1, b1, w2, b2, w3, b3):
    h1 = jax.nn.relu(z @ w1 + b1)
    h2 = jax.nn.relu(h1 @ w2 + b2)
    return jax.nn.sigmoid(h2 @ w3 + b3)


if __name__ == "__main__":
    # Small shapes consistent with the module: latent_dim=64, hidden dims 64 and
    # 128; output_dim=784 exercises the non-multiple-of-128 output padding path.
    latent_dim = 64
    h1_dim = 64
    h2_dim = 128
    output_dim = 784
    batch = 64

    key = jax.random.PRNGKey(0)
    kz, k1, k2, k3, kb1, kb2, kb3 = jax.random.split(key, 7)

    z = jax.random.normal(kz, (batch, latent_dim), dtype=jnp.float32)

    # Deterministic parameter init (scaled normal, roughly Kaiming-ish).
    w1 = jax.random.normal(k1, (latent_dim, h1_dim), dtype=jnp.float32) * (1.0 / latent_dim) ** 0.5
    b1 = jax.random.normal(kb1, (h1_dim,), dtype=jnp.float32) * 0.01
    w2 = jax.random.normal(k2, (h1_dim, h2_dim), dtype=jnp.float32) * (1.0 / h1_dim) ** 0.5
    b2 = jax.random.normal(kb2, (h2_dim,), dtype=jnp.float32) * 0.01
    w3 = jax.random.normal(k3, (h2_dim, output_dim), dtype=jnp.float32) * (1.0 / h2_dim) ** 0.5
    b3 = jax.random.normal(kb3, (output_dim,), dtype=jnp.float32) * 0.01

    out = decoder_forward(z, w1, b1, w2, b2, w3, b3)
    out = jax.block_until_ready(out)

    ref = reference_forward(z, w1, b1.reshape(1, -1), w2, b2.reshape(1, -1),
                            w3, b3.reshape(1, -1))
    assert out.shape == (batch, output_dim)
    # bf16 matmul operands + bf16 output + approx reciprocal -> relaxed tolerance.
    assert jnp.allclose(out.astype(jnp.float32), ref, atol=2e-2, rtol=2e-2), \
        "mismatch vs pure-JAX reference"

    print("KERNEL_OK")
</pallas_src>

<mosaic_0001>
module attributes {stable_mosaic.version = 11 : i64} {
  func.func @decoder_kernel(%arg0: i32, %arg1: memref<64x64xbf16, #tpu.memory_space<vmem>>, %arg2: memref<64x128xbf16, #tpu.memory_space<vmem>>, %arg3: memref<1x128xf32, #tpu.memory_space<vmem>>, %arg4: memref<128x128xbf16, #tpu.memory_space<vmem>>, %arg5: memref<1x128xf32, #tpu.memory_space<vmem>>, %arg6: memref<128x896xbf16, #tpu.memory_space<vmem>>, %arg7: memref<1x896xf32, #tpu.memory_space<vmem>>, %arg8: memref<64x896xbf16, #tpu.memory_space<vmem>>) attributes {dimension_semantics = [#tpu.dimension_semantics<parallel>], iteration_bounds = array<i64: 1>, scalar_prefetch = 0 : i64, scratch_operands = 0 : i64, tpu.core_type = #tpu.core_type<tc>, window_params = [{transform_indices = @transform_0, window_bounds = array<i64: 64, 64>}, {pipeline_mode = #tpu.pipeline_mode<synchronous>, transform_indices = @transform_1, window_bounds = array<i64: 64, 128>}, {pipeline_mode = #tpu.pipeline_mode<synchronous>, transform_indices = @transform_2, window_bounds = array<i64: 1, 128>}, {pipeline_mode = #tpu.pipeline_mode<synchronous>, transform_indices = @transform_3, window_bounds = array<i64: 128, 128>}, {pipeline_mode = #tpu.pipeline_mode<synchronous>, transform_indices = @transform_4, window_bounds = array<i64: 1, 128>}, {pipeline_mode = #tpu.pipeline_mode<synchronous>, transform_indices = @transform_5, window_bounds = array<i64: 128, 896>}, {pipeline_mode = #tpu.pipeline_mode<synchronous>, transform_indices = @transform_6, window_bounds = array<i64: 1, 896>}, {transform_indices = @transform_7, window_bounds = array<i64: 64, 896>}]} {
    %c0 = arith.constant 0 : index
    %c0_0 = arith.constant 0 : index
    %0 = vector.load %arg1[%c0, %c0_0] : memref<64x64xbf16, #tpu.memory_space<vmem>>, vector<64x64xbf16>
    %c0_1 = arith.constant 0 : index
    %c0_2 = arith.constant 0 : index
    %1 = vector.load %arg2[%c0_1, %c0_2] : memref<64x128xbf16, #tpu.memory_space<vmem>>, vector<64x128xbf16>
    %cst = arith.constant dense<0.000000e+00> : vector<64x128xf32>
    %2 = tpu.matmul %0, %1, %cst {dimension_numbers = #tpu.dot_dimension_numbers<[1], [0], [0], [1], [0, 0, 1, 1], [], []>} : vector<64x64xbf16>, vector<64x128xbf16>, vector<64x128xf32> -> vector<64x128xf32>
    %c0_3 = arith.constant 0 : index
    %c0_4 = arith.constant 0 : index
    %3 = vector.load %arg3[%c0_3, %c0_4] : memref<1x128xf32, #tpu.memory_space<vmem>>, vector<1x128xf32>
    %4 = vector.broadcast %3 : vector<1x128xf32> to vector<64x128xf32>
    %5 = arith.addf %2, %4 : vector<64x128xf32>
    %cst_5 = arith.constant 0.000000e+00 : f32
    %6 = vector.broadcast %cst_5 : f32 to vector<64x128xf32>
    %7 = arith.maximumf %5, %6 : vector<64x128xf32>
    %8 = arith.truncf %7 : vector<64x128xf32> to vector<64x128xbf16>
    %c0_6 = arith.constant 0 : index
    %c0_7 = arith.constant 0 : index
    %9 = vector.load %arg4[%c0_6, %c0_7] : memref<128x128xbf16, #tpu.memory_space<vmem>>, vector<128x128xbf16>
    %cst_8 = arith.constant dense<0.000000e+00> : vector<64x128xf32>
    %10 = tpu.matmul %8, %9, %cst_8 {dimension_numbers = #tpu.dot_dimension_numbers<[1], [0], [0], [1], [0, 0, 1, 1], [], []>} : vector<64x128xbf16>, vector<128x128xbf16>, vector<64x128xf32> -> vector<64x128xf32>
    %c0_9 = arith.constant 0 : index
    %c0_10 = arith.constant 0 : index
    %11 = vector.load %arg5[%c0_9, %c0_10] : memref<1x128xf32, #tpu.memory_space<vmem>>, vector<1x128xf32>
    %12 = vector.broadcast %11 : vector<1x128xf32> to vector<64x128xf32>
    %13 = arith.addf %10, %12 : vector<64x128xf32>
    %cst_11 = arith.constant 0.000000e+00 : f32
    %14 = vector.broadcast %cst_11 : f32 to vector<64x128xf32>
    %15 = arith.maximumf %13, %14 : vector<64x128xf32>
    %16 = arith.truncf %15 : vector<64x128xf32> to vector<64x128xbf16>
    %c0_12 = arith.constant 0 : index
    %c0_13 = arith.constant 0 : index
    %17 = vector.load %arg6[%c0_12, %c0_13] : memref<128x896xbf16, #tpu.memory_space<vmem>>, vector<128x896xbf16>
    %cst_14 = arith.constant dense<0.000000e+00> : vector<64x896xf32>
    %18 = tpu.matmul %16, %17, %cst_14 {dimension_numbers = #tpu.dot_dimension_numbers<[1], [0], [0], [1], [0, 0, 1, 1], [], []>} : vector<64x128xbf16>, vector<128x896xbf16>, vector<64x896xf32> -> vector<64x896xf32>
    %c0_15 = arith.constant 0 : index
    %c0_16 = arith.constant 0 : index
    %19 = vector.load %arg7[%c0_15, %c0_16] : memref<1x896xf32, #tpu.memory_space<vmem>>, vector<1x896xf32>
    %20 = vector.broadcast %19 : vector<1x896xf32> to vector<64x896xf32>
    %21 = arith.addf %18, %20 : vector<64x896xf32>
    %cst_17 = arith.constant 0.000000e+00 : f32
    %22 = vector.broadcast %cst_17 : f32 to vector<64x896xf32>
    %23 = arith.subf %22, %21 : vector<64x896xf32>
    %24 = math.exp %23 : vector<64x896xf32>
    %cst_18 = arith.constant 1.000000e+00 : f32
    %25 = vector.broadcast %cst_18 : f32 to vector<64x896xf32>
    %26 = arith.addf %25, %24 : vector<64x896xf32>
    %27 = tpu.reciprocal %26 {approx = true} : vector<64x896xf32> -> vector<64x896xf32>
    %28 = arith.truncf %27 : vector<64x896xf32> to vector<64x896xbf16>
    %c0_19 = arith.constant 0 : index
    %c0_20 = arith.constant 0 : index
    %29 = vector.load %arg8[%c0_19, %c0_20] : memref<64x896xbf16, #tpu.memory_space<vmem>>, vector<64x896xbf16>
    tpu.vector_store %arg8[%c0_19, %c0_20], %28 {strides = array<i32>} : memref<64x896xbf16, #tpu.memory_space<vmem>>, vector<64x896xbf16>,
    return
  }
  func.func @transform_0(%arg0: i32) -> (i32, i32) {
    %c0_i32 = arith.constant 0 : i32
    %c0_i32_0 = arith.constant 0 : i32
    return %arg0, %c0_i32 : i32, i32
  }
  func.func @transform_1(%arg0: i32) -> (i32, i32) {
    %c0_i32 = arith.constant 0 : i32
    %c0_i32_0 = arith.constant 0 : i32
    %c0_i32_1 = arith.constant 0 : i32
    return %c0_i32, %c0_i32_0 : i32, i32
  }
  func.func @transform_2(%arg0: i32) -> (i32, i32) {
    %c0_i32 = arith.constant 0 : i32
    %c0_i32_0 = arith.constant 0 : i32
    %c0_i32_1 = arith.constant 0 : i32
    return %c0_i32, %c0_i32_0 : i32, i32
  }
  func.func @transform_3(%arg0: i32) -> (i32, i32) {
    %c0_i32 = arith.constant 0 : i32
    %c0_i32_0 = arith.constant 0 : i32
    %c0_i32_1 = arith.constant 0 : i32
    return %c0_i32, %c0_i32_0 : i32, i32
  }
  func.func @transform_4(%arg0: i32) -> (i32, i32) {
    %c0_i32 = arith.constant 0 : i32
    %c0_i32_0 = arith.constant 0 : i32
    %c0_i32_1 = arith.constant 0 : i32
    return %c0_i32, %c0_i32_0 : i32, i32
  }
  func.func @transform_5(%arg0: i32) -> (i32, i32) {
    %c0_i32 = arith.constant 0 : i32
    %c0_i32_0 = arith.constant 0 : i32
    %c0_i32_1 = arith.constant 0 : i32
    return %c0_i32, %c0_i32_0 : i32, i32
  }
  func.func @transform_6(%arg0: i32) -> (i32, i32) {
    %c0_i32 = arith.constant 0 : i32
    %c0_i32_0 = arith.constant 0 : i32
    %c0_i32_1 = arith.constant 0 : i32
    return %c0_i32, %c0_i32_0 : i32, i32
  }
  func.func @transform_7(%arg0: i32) -> (i32, i32) {
    %c0_i32 = arith.constant 0 : i32
    %c0_i32_0 = arith.constant 0 : i32
    return %arg0, %c0_i32 : i32, i32
  }
}

</mosaic_0001>

<llo_original>
// kernel: tpu_custom_call.1
$region0: #{tpu_custom_call.1}
  #allocation0 [shape = 'u32[]', space=smem, size = 0x4, offset = 0x4, fixed_abs, tag = 'smem constant byte address 0x4 - core index']
  #allocation1 [shape = 'u32[144,128]{1,0:T(1,128)}', space=vmem, size = 0x12000, scoped, tag = 'internal scratch']
  %s0 = inlined_call_operand.hbm [shape: bf16[64,64], index: 0, kind: input, shape index: {}]
  %s1 = inlined_call_operand.hbm [shape: bf16[64,128], index: 1, kind: input, shape index: {}]
  %s2 = inlined_call_operand.vmem [shape: f32[1,128], index: 2, kind: input, shape index: {}]
  %s3 = inlined_call_operand.hbm [shape: bf16[128,128], index: 3, kind: input, shape index: {}]
  %s4 = inlined_call_operand.vmem [shape: f32[1,128], index: 4, kind: input, shape index: {}]
  %s5 = inlined_call_operand.hbm [shape: bf16[128,896], index: 5, kind: input, shape index: {}]
  %s6 = inlined_call_operand.vmem [shape: f32[1,896], index: 6, kind: input, shape index: {}]
  %s7 = inlined_call_operand.hbm [shape: bf16[64,896], index: 7, kind: output, shape index: {}]
  %s8 = sld [smem:[#allocation0]]
  $region54: #{tpu_custom_call.1} parent=0
    _
  %s10 = ssub.s32 1, %s8
  %s11 = scalar_select 0, %s10, %s8
  $region1: #{tpu_custom_call.1} parent=0
    #allocation2 [shape = 'u8[16384]{0}', space=vmem, size = 0x4000, scoped, tag = 'input window, operand 0, single buffered']
    #allocation3 [shape = 's32[1]{0}', space=sflag, size = 0x4, scoped, tag = 'scoped memory for tpu_custom_call.1']
    #allocation4 [shape = 's32[1]{0}', space=sflag, size = 0x4, scoped, tag = 'scoped memory for tpu_custom_call.1']
    #allocation5 [shape = 'u8[16384]{0}', space=vmem, size = 0x4000, scoped, tag = 'input window, operand 1, single buffered']
    #allocation6 [shape = 's32[1]{0}', space=sflag, size = 0x4, scoped, tag = 'scoped memory for tpu_custom_call.1']
    #allocation7 [shape = 'u8[32768]{0}', space=vmem, size = 0x8000, scoped, tag = 'input window, operand 3, single buffered']
    #allocation8 [shape = 'u8[229376]{0}', space=vmem, size = 0x38000, scoped, tag = 'input window, operand 5, single buffered']
    #allocation9 [shape = 's32[1]{0}', space=sflag, size = 0x4, scoped, tag = 'scoped memory for tpu_custom_call.1']
    #allocation10 [shape = 'u8[114688]{0}', space=vmem, size = 0x1c000, scoped, tag = 'output window, operand 0, single buffered']
    %12 = vsyncpa [#allocation3], 0
    %13 = vsyncpa [#allocation6], 0
    %14 = vsyncpa [#allocation9], 0
    %15 = vsyncpa [#allocation4], 0
    // Predicated region
    $region2: #{tpu_custom_call.1} parent=1 // pred_check
      _
    $region3: #{tpu_custom_call.1} parent=1 // pred_check_branch
      %17 = sbr.rel (0) target = $region5
    $region4: #{tpu_custom_call.1} parent=1 // pred_region
      %s19 = ssub.s32 512, 512
      %20 = vsyncadd [#allocation3], %s19
      %s21 = sshll.u32 [#allocation2], 4
      %s22 = int_to_ptr.vmem [resolvable:$true] %s21
      %27 = dma.hbm_to_vmem [thread:$0]  %s0, 512, %s22, [#allocation3], 64, 64, 4
    $region5: #{tpu_custom_call.1} parent=1 // pred_fallthru
      _
    // Predicated region
    $region6: #{tpu_custom_call.1} parent=1 // pred_check
      _
    $region7: #{tpu_custom_call.1} parent=1 // pred_check_branch
      %29 = sbr.rel (0) target = $region9
    $region8: #{tpu_custom_call.1} parent=1 // pred_region
      %s31 = ssub.s32 512, 512
      %32 = vsyncadd [#allocation6], %s31
      %s33 = sshll.u32 [#allocation5], 4
      %s34 = int_to_ptr.vmem [resolvable:$true] %s33
      %39 = dma.hbm_to_vmem [thread:$0]  %s1, 512, %s34, [#allocation6], 64, 64, 4
    $region9: #{tpu_custom_call.1} parent=1 // pred_fallthru
      _
    // Predicated region
    $region10: #{tpu_custom_call.1} parent=1 // pred_check
      _
    $region11: #{tpu_custom_call.1} parent=1 // pred_check_branch
      %41 = sbr.rel (0) target = $region13
    $region12: #{tpu_custom_call.1} parent=1 // pred_region
      _
    $region13: #{tpu_custom_call.1} parent=1 // pred_fallthru
      _
    // Predicated region
    $region14: #{tpu_custom_call.1} parent=1 // pred_check
      _
    $region15: #{tpu_custom_call.1} parent=1 // pred_check_branch
      %43 = sbr.rel (0) target = $region17
    $region16: #{tpu_custom_call.1} parent=1 // pred_region
      %s45 = ssub.s32 1024, 1024
      %46 = vsyncadd [#allocation6], %s45
      %s47 = sshll.u32 [#allocation7], 4
      %s48 = int_to_ptr.vmem [resolvable:$true] %s47
      %53 = dma.hbm_to_vmem [thread:$0]  %s3, 1024, %s48, [#allocation6], 64, 64, 4
    $region17: #{tpu_custom_call.1} parent=1 // pred_fallthru
      _
    // Predicated region
    $region18: #{tpu_custom_call.1} parent=1 // pred_check
      _
    $region19: #{tpu_custom_call.1} parent=1 // pred_check_branch
      %55 = sbr.rel (0) target = $region21
    $region20: #{tpu_custom_call.1} parent=1 // pred_region
      _
    $region21: #{tpu_custom_call.1} parent=1 // pred_fallthru
      _
    // Predicated region
    $region22: #{tpu_custom_call.1} parent=1 // pred_check
      _
    $region23: #{tpu_custom_call.1} parent=1 // pred_check_branch
      %57 = sbr.rel (0) target = $region25
    $region24: #{tpu_custom_call.1} parent=1 // pred_region
      %s59 = ssub.s32 7168, 7168
      %60 = vsyncadd [#allocation9], %s59
      %s61 = sshll.u32 [#allocation8], 4
      %s62 = int_to_ptr.vmem [resolvable:$true] %s61
      %67 = dma.hbm_to_vmem [thread:$0]  %s5, 7168, %s62, [#allocation9], 448, 448, 28
    $region25: #{tpu_custom_call.1} parent=1 // pred_fallthru
      _
    // Predicated region
    $region26: #{tpu_custom_call.1} parent=1 // pred_check
      _
    $region27: #{tpu_custom_call.1} parent=1 // pred_check_branch
      %69 = sbr.rel (0) target = $region29
    $region28: #{tpu_custom_call.1} parent=1 // pred_region
      _
    $region29: #{tpu_custom_call.1} parent=1 // pred_fallthru
      _
    // Predicated region
    $region30: #{tpu_custom_call.1} parent=1 // pred_check
      _
    $region31: #{tpu_custom_call.1} parent=1 // pred_check_branch
      %71 = sbr.rel (0) target = $region33
    $region32: #{tpu_custom_call.1} parent=1 // pred_region
      %72 = dma.done [#allocation3], 512
    $region33: #{tpu_custom_call.1} parent=1 // pred_fallthru
      _
    // Predicated region
    $region34: #{tpu_custom_call.1} parent=1 // pred_check
      _
    $region35: #{tpu_custom_call.1} parent=1 // pred_check_branch
      %74 = sbr.rel (0) target = $region37
    $region36: #{tpu_custom_call.1} parent=1 // pred_region
      %75 = dma.done [#allocation6], 512
    $region37: #{tpu_custom_call.1} parent=1 // pred_fallthru
      _
    // Predicated region
    $region38: #{tpu_custom_call.1} parent=1 // pred_check
      _
    $region39: #{tpu_custom_call.1} parent=1 // pred_check_branch
      %77 = sbr.rel (0) target = $region41
    $region40: #{tpu_custom_call.1} parent=1 // pred_region
      %78 = dma.done [#allocation6], 1024
    $region41: #{tpu_custom_call.1} parent=1 // pred_fallthru
      _
    // Predicated region
    $region42: #{tpu_custom_call.1} parent=1 // pred_check
      _
    $region43: #{tpu_custom_call.1} parent=1 // pred_check_branch
      %80 = sbr.rel (0) target = $region45
    $region44: #{tpu_custom_call.1} parent=1 // pred_region
      %81 = dma.done [#allocation9], 7168
    $region45: #{tpu_custom_call.1} parent=1 // pred_fallthru
      _
    %v83 = vld [vmem:[#allocation2] sm:$0xf]
    %v84 = vld [vmem:[#allocation2 + $0x4] sm:$0xf]
    %v85 = vld [vmem:[#allocation2 + $0x8] sm:$0xf]
    %v86 = vld [vmem:[#allocation2 + $0xc] sm:$0xf]
    %v87 = vld [vmem:[#allocation2 + $0x10] sm:$0xf]
    %v88 = vld [vmem:[#allocation2 + $0x14] sm:$0xf]
    %v89 = vld [vmem:[#allocation2 + $0x18] sm:$0xf]
    %v90 = vld [vmem:[#allocation2 + $0x1c] sm:$0xf]
    %v91 = vld [vmem:[#allocation5] sm:$0xf]
    %v92 = vld [vmem:[#allocation5 + $0x4] sm:$0xf]
    %v93 = vld [vmem:[#allocation5 + $0x8] sm:$0xf]
    %v94 = vld [vmem:[#allocation5 + $0xc] sm:$0xf]
    %v95 = vld [vmem:[#allocation5 + $0x10] sm:$0xf]
    %v96 = vld [vmem:[#allocation5 + $0x14] sm:$0xf]
    %v97 = vld [vmem:[#allocation5 + $0x18] sm:$0xf]
    %v98 = vld [vmem:[#allocation5 + $0x1c] sm:$0xf]
    %v99 = vld [vmem:[%s2] sm:$0x1]
    %v101 = vlaneseq
    %v102 = vshrl.u32 %v101, 7
    %v103 = vsub.s32 0, %v102
    %v104 = vrot.slane %v99, %v103
    %v114 = vunpack.c.l.b16 %v83
    %v115 = vunpack.c.l.b16 %v84
    %v116 = vunpack.c.l.b16 %v85
    %v117 = vunpack.c.l.b16 %v86
    %v118 = vunpack.c.l.b16 %v87
    %v119 = vunpack.c.l.b16 %v88
    %v120 = vunpack.c.l.b16 %v89
    %v121 = vunpack.c.l.b16 %v90
    %v122 = vpack.c.b16 %v115, %v114
    %v123 = vpack.c.b16 %v117, %v116
    %v124 = vpack.c.b16 %v119, %v118
    %v125 = vpack.c.b16 %v121, %v120
    %v134 = vunpack.c.l.b16 %v91
    %v135 = vunpack.c.l.b16 %v92
    %v136 = vunpack.c.l.b16 %v93
    %v137 = vunpack.c.l.b16 %v94
    %v138 = vunpack.c.l.b16 %v95
    %v139 = vunpack.c.l.b16 %v96
    %v140 = vunpack.c.l.b16 %v97
    %v141 = vunpack.c.l.b16 %v98
    %v142 = vpack.c.b16 %v135, %v134
    %v143 = vpack.c.b16 %v137, %v136
    %v144 = vpack.c.b16 %v139, %v138
    %v145 = vpack.c.b16 %v141, %v140
    %vm150 = vcmask 523264
    %v152 = vsel %vm150, %v122, 0
    %v155 = vsel %vm150, %v123, 0
    %v158 = vsel %vm150, %v124, 0
    %v161 = vsel %vm150, %v125, 0
    %163 = vmatprep.subr.bf16.mxu0 0
    %164 = vmatpush1.bf16.msra.mxu0 %v142
    %165 = vmatprep.subr.bf16.mxu0 0
    %166 = vmatpush1.bf16.msra.mxu0 %v143
    %167 = vmatprep.subr.bf16.mxu0 0
    %168 = vmatpush1.bf16.msra.mxu0 %v144
    %169 = vmatprep.subr.bf16.mxu0 0
    %170 = vmatpush1.bf16.msra.mxu0 %v145
    %171 = vmatprep.subr.bf16.mxu0 0
    %172 = vmatpush1.bf16.msra.mxu0 0
    %173 = vmatprep.subr.bf16.mxu0 0
    %174 = vmatpush1.bf16.msra.mxu0 0
    %175 = vmatprep.subr.bf16.mxu0 0
    %176 = vmatpush1.bf16.msra.mxu0 0
    %177 = vmatprep.subr.bf16.mxu0 0
    %178 = vmatpush1.bf16.msra.mxu0 0
    %179 = vmatprep.subr.bf16.mxu0 0
    %180 = vmatpush1.bf16.msra.mxu0 0
    %181 = vmatprep.subr.bf16.mxu0 0
    %182 = vmatpush1.bf16.msra.mxu0 0
    %183 = vmatprep.subr.bf16.mxu0 0
    %184 = vmatpush1.bf16.msra.mxu0 0
    %185 = vmatprep.subr.bf16.mxu0 0
    %186 = vmatpush1.bf16.msra.mxu0 0
    %187 = vmatprep.subr.bf16.mxu0 0
    %188 = vmatpush1.bf16.msra.mxu0 0
    %189 = vmatprep.subr.bf16.mxu0 0
    %190 = vmatpush1.bf16.msra.mxu0 0
    %191 = vmatprep.subr.bf16.mxu0 0
    %192 = vmatpush1.bf16.msra.mxu0 0
    %193 = vmatprep.subr.bf16.mxu0 0
    %194 = vmatpush1.bf16.msra.mxu0 0
    %195 = vmatprep.mubr.bf16.mxu0 0
    %196 = vmatmul.mubr.bf16.gmra.mrb[0].mxu0 %v152
    %v197 = vpop.f32.mrb[0].mxu0
    %v198 = vadd.f32 %v104, %v197
    %v199 = vpop.f32.mrb[0].mxu0
    %v200 = vpop.f32.mrb[0].mxu0
    %v201 = vadd.f32 %v104, %v200
    %v202 = vpop.f32.mrb[0].mxu0
    %203 = vmatprep.mubr.bf16.mxu0 0
    %204 = vmatmul.mubr.bf16.gmra.mrb[0].mxu0 %v155
    %v205 = vpop.f32.mrb[0].mxu0
    %v206 = vadd.f32 %v104, %v205
    %v207 = vpop.f32.mrb[0].mxu0
    %v208 = vpop.f32.mrb[0].mxu0
    %v209 = vadd.f32 %v104, %v208
    %v210 = vpop.f32.mrb[0].mxu0
    %211 = vmatprep.mubr.bf16.mxu0 0
    %212 = vmatmul.mubr.bf16.gmra.mrb[0].mxu0 %v158
    %v213 = vpop.f32.mrb[0].mxu0
    %v214 = vadd.f32 %v104, %v213
    %v215 = vpop.f32.mrb[0].mxu0
    %v216 = vpop.f32.mrb[0].mxu0
    %v217 = vadd.f32 %v104, %v216
    %v218 = vpop.f32.mrb[0].mxu0
    %219 = vmatprep.mubr.bf16.mxu0 0
    %220 = vmatmul.mubr.bf16.gmra.mrb[0].mxu0 %v161
    %v221 = vpop.f32.mrb[0].mxu0
    %v222 = vadd.f32 %v104, %v221
    %v223 = vpop.f32.mrb[0].mxu0
    %v224 = vpop.f32.mrb[0].mxu0
    %v225 = vadd.f32 %v104, %v224
    %v226 = vpop.f32.mrb[0].mxu0
    %227 = vdwg.mxu0
    %v228 = vmax.f32 %v198, 0.0
    %v229 = vmax.f32 %v201, 0.0
    %v230 = vmax.f32 %v206, 0.0
    %v231 = vmax.f32 %v209, 0.0
    %v232 = vmax.f32 %v214, 0.0
    %v233 = vmax.f32 %v217, 0.0
    %v234 = vmax.f32 %v222, 0.0
    %v235 = vmax.f32 %v225, 0.0
    %v236 = vpack.c.bf16 %v229, %v228
    %v237 = vpack.c.bf16 %v231, %v230
    %v238 = vpack.c.bf16 %v233, %v232
    %v239 = vpack.c.bf16 %v235, %v234
    %v240 = vld [vmem:[#allocation7] sm:$0xf]
    %v241 = vld [vmem:[#allocation7 + $0x4] sm:$0xf]
    %v242 = vld [vmem:[#allocation7 + $0x8] sm:$0xf]
    %v243 = vld [vmem:[#allocation7 + $0xc] sm:$0xf]
    %v244 = vld [vmem:[#allocation7 + $0x10] sm:$0xf]
    %v245 = vld [vmem:[#allocation7 + $0x14] sm:$0xf]
    %v246 = vld [vmem:[#allocation7 + $0x18] sm:$0xf]
    %v247 = vld [vmem:[#allocation7 + $0x1c] sm:$0xf]
    %v248 = vld [vmem:[#allocation7 + $0x20] sm:$0xf]
    %v249 = vld [vmem:[#allocation7 + $0x24] sm:$0xf]
    %v250 = vld [vmem:[#allocation7 + $0x28] sm:$0xf]
    %v251 = vld [vmem:[#allocation7 + $0x2c] sm:$0xf]
    %v252 = vld [vmem:[#allocation7 + $0x30] sm:$0xf]
    %v253 = vld [vmem:[#allocation7 + $0x34] sm:$0xf]
    %v254 = vld [vmem:[#allocation7 + $0x38] sm:$0xf]
    %v255 = vld [vmem:[#allocation7 + $0x3c] sm:$0xf]
    %v256 = vld [vmem:[%s4] sm:$0x1]
    %v258 = vlaneseq
    %v259 = vshrl.u32 %v258, 7
    %v260 = vsub.s32 0, %v259
    %v261 = vrot.slane %v256, %v260
    %v279 = vunpack.c.l.b16 %v240
    %v280 = vunpack.c.l.b16 %v241
    %v281 = vunpack.c.l.b16 %v242
    %v282 = vunpack.c.l.b16 %v243
    %v283 = vunpack.c.l.b16 %v244
    %v284 = vunpack.c.l.b16 %v245
    %v285 = vunpack.c.l.b16 %v246
    %v286 = vunpack.c.l.b16 %v247
    %v287 = vunpack.c.l.b16 %v248
    %v288 = vunpack.c.l.b16 %v249
    %v289 = vunpack.c.l.b16 %v250
    %v290 = vunpack.c.l.b16 %v251
    %v291 = vunpack.c.l.b16 %v252
    %v292 = vunpack.c.l.b16 %v253
    %v293 = vunpack.c.l.b16 %v254
    %v294 = vunpack.c.l.b16 %v255
    %v295 = vpack.c.b16 %v280, %v279
    %v296 = vpack.c.b16 %v282, %v281
    %v297 = vpack.c.b16 %v284, %v283
    %v298 = vpack.c.b16 %v286, %v285
    %v299 = vpack.c.b16 %v288, %v287
    %v300 = vpack.c.b16 %v290, %v289
    %v301 = vpack.c.b16 %v292, %v291
    %v302 = vpack.c.b16 %v294, %v293
    %311 = vmatprep.subr.bf16.mxu0 0
    %312 = vmatpush1.bf16.msra.mxu0 %v295
    %313 = vmatprep.subr.bf16.mxu0 0
    %314 = vmatpush1.bf16.msra.mxu0 %v296
    %315 = vmatprep.subr.bf16.mxu0 0
    %316 = vmatpush1.bf16.msra.mxu0 %v297
    %317 = vmatprep.subr.bf16.mxu0 0
    %318 = vmatpush1.bf16.msra.mxu0 %v298
    %319 = vmatprep.subr.bf16.mxu0 0
    %320 = vmatpush1.bf16.msra.mxu0 %v299
    %321 = vmatprep.subr.bf16.mxu0 0
    %322 = vmatpush1.bf16.msra.mxu0 %v300
    %323 = vmatprep.subr.bf16.mxu0 0
    %324 = vmatpush1.bf16.msra.mxu0 %v301
    %325 = vmatprep.subr.bf16.mxu0 0
    %326 = vmatpush1.bf16.msra.mxu0 %v302
    %327 = vmatprep.subr.bf16.mxu0 0
    %328 = vmatpush1.bf16.msra.mxu0 0
    %329 = vmatprep.subr.bf16.mxu0 0
    %330 = vmatpush1.bf16.msra.mxu0 0
    %331 = vmatprep.subr.bf16.mxu0 0
    %332 = vmatpush1.bf16.msra.mxu0 0
    %333 = vmatprep.subr.bf16.mxu0 0
    %334 = vmatpush1.bf16.msra.mxu0 0
    %335 = vmatprep.subr.bf16.mxu0 0
    %336 = vmatpush1.bf16.msra.mxu0 0
    %337 = vmatprep.subr.bf16.mxu0 0
    %338 = vmatpush1.bf16.msra.mxu0 0
    %339 = vmatprep.subr.bf16.mxu0 0
    %340 = vmatpush1.bf16.msra.mxu0 0
    %341 = vmatprep.subr.bf16.mxu0 0
    %342 = vmatpush1.bf16.msra.mxu0 0
    %343 = vmatprep.mubr.bf16.mxu0 0
    %344 = vmatmul.mubr.bf16.gmra.mrb[0].mxu0 %v236
    %v345 = vpop.f32.mrb[0].mxu0
    %v346 = vadd.f32 %v261, %v345
    %v347 = vpop.f32.mrb[0].mxu0
    %v348 = vpop.f32.mrb[0].mxu0
    %v349 = vadd.f32 %v261, %v348
    %v350 = vpop.f32.mrb[0].mxu0
    %351 = vmatprep.mubr.bf16.mxu0 0
    %352 = vmatmul.mubr.bf16.gmra.mrb[0].mxu0 %v237
    %v353 = vpop.f32.mrb[0].mxu0
    %v354 = vadd.f32 %v261, %v353
    %v355 = vpop.f32.mrb[0].mxu0
    %v356 = vpop.f32.mrb[0].mxu0
    %v357 = vadd.f32 %v261, %v356
    %v358 = vpop.f32.mrb[0].mxu0
    %359 = vmatprep.mubr.bf16.mxu0 0
    %360 = vmatmul.mubr.bf16.gmra.mrb[0].mxu0 %v238
    %v361 = vpop.f32.mrb[0].mxu0
    %v362 = vadd.f32 %v261, %v361
    %v363 = vpop.f32.mrb[0].mxu0
    %v364 = vpop.f32.mrb[0].mxu0
    %v365 = vadd.f32 %v261, %v364
    %v366 = vpop.f32.mrb[0].mxu0
    %367 = vmatprep.mubr.bf16.mxu0 0
    %368 = vmatmul.mubr.bf16.gmra.mrb[0].mxu0 %v239
    %v369 = vpop.f32.mrb[0].mxu0
    %v370 = vadd.f32 %v261, %v369
    %v371 = vpop.f32.mrb[0].mxu0
    %v372 = vpop.f32.mrb[0].mxu0
    %v373 = vadd.f32 %v261, %v372
    %v374 = vpop.f32.mrb[0].mxu0
    %375 = vdwg.mxu0
    %v376 = vmax.f32 %v346, 0.0
    %v377 = vmax.f32 %v349, 0.0
    %v378 = vmax.f32 %v354, 0.0
    %v379 = vmax.f32 %v357, 0.0
    %v380 = vmax.f32 %v362, 0.0
    %v381 = vmax.f32 %v365, 0.0
    %v382 = vmax.f32 %v370, 0.0
    %v383 = vmax.f32 %v373, 0.0
    %v384 = vpack.c.bf16 %v377, %v376
    %v385 = vpack.c.bf16 %v379, %v378
    %v386 = vpack.c.bf16 %v381, %v380
    %v387 = vpack.c.bf16 %v383, %v382
    %v388 = vld [vmem:[#allocation8] sm:$0xff]
    %v389 = vld [vmem:[#allocation8 + $0x8] sm:$0xff]
    %v390 = vld [vmem:[#allocation8 + $0x10] sm:$0xff]
    %v391 = vld [vmem:[#allocation8 + $0x18] sm:$0xf]
    %v392 = vld [vmem:[#allocation8 + $0x1c] sm:$0xff]
    %v393 = vld [vmem:[#allocation8 + $0x24] sm:$0xff]
    %v394 = vld [vmem:[#allocation8 + $0x2c] sm:$0xff]
    %v395 = vld [vmem:[#allocation8 + $0x34] sm:$0xf]
    %v396 = vld [vmem:[#allocation8 + $0x38] sm:$0xff]
    %v397 = vld [vmem:[#allocation8 + $0x40] sm:$0xff]
    %v398 = vld [vmem:[#allocation8 + $0x48] sm:$0xff]
    %v399 = vld [vmem:[#allocation8 + $0x50] sm:$0xf]
    %v400 = vld [vmem:[#allocation8 + $0x54] sm:$0xff]
    %v401 = vld [vmem:[#allocation8 + $0x5c] sm:$0xff]
    %v402 = vld [vmem:[#allocation8 + $0x64] sm:$0xff]
    %v403 = vld [vmem:[#allocation8 + $0x6c] sm:$0xf]
    %v404 = vld [vmem:[#allocation8 + $0x70] sm:$0xff]
    %v405 = vld [vmem:[#allocation8 + $0x78] sm:$0xff]
    %v406 = vld [vmem:[#allocation8 + $0x80] sm:$0xff]
    %v407 = vld [vmem:[#allocation8 + $0x88] sm:$0xf]
    %v408 = vld [vmem:[#allocation8 + $0x8c] sm:$0xff]
    %v409 = vld [vmem:[#allocation8 + $0x94] sm:$0xff]
    %v410 = vld [vmem:[#allocation8 + $0x9c] sm:$0xff]
    %v411 = vld [vmem:[#allocation8 + $0xa4] sm:$0xf]
    %v412 = vld [vmem:[#allocation8 + $0xa8] sm:$0xff]
    %v413 = vld [vmem:[#allocation8 + $0xb0] sm:$0xff]
    %v414 = vld [vmem:[#allocation8 + $0xb8] sm:$0xff]
    %v415 = vld [vmem:[#allocation8 + $0xc0] sm:$0xf]
    %v416 = vld [vmem:[#allocation8 + $0xc4] sm:$0xff]
    %v417 = vld [vmem:[#allocation8 + $0xcc] sm:$0xff]
    %v418 = vld [vmem:[#allocation8 + $0xd4] sm:$0xff]
    %v419 = vld [vmem:[#allocation8 + $0xdc] sm:$0xf]
    %v420 = vld [vmem:[#allocation8 + $0xe0] sm:$0xff]
    %v421 = vld [vmem:[#allocation8 + $0xe8] sm:$0xff]
    %v422 = vld [vmem:[#allocation8 + $0xf0] sm:$0xff]
    %v423 = vld [vmem:[#allocation8 + $0xf8] sm:$0xf]
    %v424 = vld [vmem:[#allocation8 + $0xfc] sm:$0xff]
    %v425 = vld [vmem:[#allocation8 + $0x104] sm:$0xff]
    %v426 = vld [vmem:[#allocation8 + $0x10c] sm:$0xff]
    %v427 = vld [vmem:[#allocation8 + $0x114] sm:$0xf]
    %v428 = vld [vmem:[#allocation8 + $0x118] sm:$0xff]
    %v429 = vld [vmem:[#allocation8 + $0x120] sm:$0xff]
    %v430 = vld [vmem:[#allocation8 + $0x128] sm:$0xff]
    %v431 = vld [vmem:[#allocation8 + $0x130] sm:$0xf]
    %v432 = vld [vmem:[#allocation8 + $0x134] sm:$0xff]
    %v433 = vld [vmem:[#allocation8 + $0x13c] sm:$0xff]
    %v434 = vld [vmem:[#allocation8 + $0x144] sm:$0xff]
    %v435 = vld [vmem:[#allocation8 + $0x14c] sm:$0xf]
    %v436 = vld [vmem:[#allocation8 + $0x150] sm:$0xff]
    %v437 = vld [vmem:[#allocation8 + $0x158] sm:$0xff]
    %v438 = vld [vmem:[#allocation8 + $0x160] sm:$0xff]
    %v439 = vld [vmem:[#allocation8 + $0x168] sm:$0xf]
    %v440 = vld [vmem:[#allocation8 + $0x16c] sm:$0xff]
    %v441 = vld [vmem:[#allocation8 + $0x174] sm:$0xff]
    %v442 = vld [vmem:[#allocation8 + $0x17c] sm:$0xff]
    %v443 = vld [vmem:[#allocation8 + $0x184] sm:$0xf]
    %v444 = vld [vmem:[#allocation8 + $0x188] sm:$0xff]
    %v445 = vld [vmem:[#allocation8 + $0x190] sm:$0xff]
    %v446 = vld [vmem:[#allocation8 + $0x198] sm:$0xff]
    %v447 = vld [vmem:[#allocation8 + $0x1a0] sm:$0xf]
    %v448 = vld [vmem:[#allocation8 + $0x1a4] sm:$0xff]
    %v449 = vld [vmem:[#allocation8 + $0x1ac] sm:$0xff]
    %v450 = vld [vmem:[#allocation8 + $0x1b4] sm:$0xff]
    %v451 = vld [vmem:[#allocation8 + $0x1bc] sm:$0xf]
    %v452 = vld [vmem:[%s6] sm:$0xff]
    %v454 = vlaneseq
    %v455 = vshrl.u32 %v454, 7
    %v456 = vsub.s32 0, %v455
    %v457 = vrot.slane %v452, %v456
    %v458 = vlaneseq
    %v459 = vshrl.u32 %v458, 7
    %v460 = vsub.s32 1, %v459
    %v461 = vrot.slane %v452, %v460
    %v462 = vlaneseq
    %v463 = vshrl.u32 %v462, 7
    %v464 = vsub.s32 2, %v463
    %v465 = vrot.slane %v452, %v464
    %v466 = vlaneseq
    %v467 = vshrl.u32 %v466, 7
    %v468 = vsub.s32 3, %v467
    %v469 = vrot.slane %v452, %v468
    %v470 = vlaneseq
    %v471 = vshrl.u32 %v470, 7
    %v472 = vsub.s32 4, %v471
    %v473 = vrot.slane %v452, %v472
    %v474 = vlaneseq
    %v475 = vshrl.u32 %v474, 7
    %v476 = vsub.s32 5, %v475
    %v477 = vrot.slane %v452, %v476
    %v478 = vlaneseq
    %v479 = vshrl.u32 %v478, 7
    %v480 = vsub.s32 6, %v479
    %v481 = vrot.slane %v452, %v480
    %v553 = vunpack.c.l.b16 %v388
    %v554 = vunpack.c.h.b16 %v388
    %v555 = vunpack.c.l.b16 %v389
    %v556 = vunpack.c.h.b16 %v389
    %v557 = vunpack.c.l.b16 %v390
    %v558 = vunpack.c.h.b16 %v390
    %v559 = vunpack.c.l.b16 %v391
    %v560 = vunpack.c.l.b16 %v392
    %v561 = vunpack.c.h.b16 %v392
    %v562 = vunpack.c.l.b16 %v393
    %v563 = vunpack.c.h.b16 %v393
    %v564 = vunpack.c.l.b16 %v394
    %v565 = vunpack.c.h.b16 %v394
    %v566 = vunpack.c.l.b16 %v395
    %v567 = vunpack.c.l.b16 %v396
    %v568 = vunpack.c.h.b16 %v396
    %v569 = vunpack.c.l.b16 %v397
    %v570 = vunpack.c.h.b16 %v397
    %v571 = vunpack.c.l.b16 %v398
    %v572 = vunpack.c.h.b16 %v398
    %v573 = vunpack.c.l.b16 %v399
    %v574 = vunpack.c.l.b16 %v400
    %v575 = vunpack.c.h.b16 %v400
    %v576 = vunpack.c.l.b16 %v401
    %v577 = vunpack.c.h.b16 %v401
    %v578 = vunpack.c.l.b16 %v402
    %v579 = vunpack.c.h.b16 %v402
    %v580 = vunpack.c.l.b16 %v403
    %v581 = vunpack.c.l.b16 %v404
    %v582 = vunpack.c.h.b16 %v404
    %v583 = vunpack.c.l.b16 %v405
    %v584 = vunpack.c.h.b16 %v405
    %v585 = vunpack.c.l.b16 %v406
    %v586 = vunpack.c.h.b16 %v406
    %v587 = vunpack.c.l.b16 %v407
    %v588 = vunpack.c.l.b16 %v408
    %v589 = vunpack.c.h.b16 %v408
    %v590 = vunpack.c.l.b16 %v409
    %v591 = vunpack.c.h.b16 %v409
    %v592 = vunpack.c.l.b16 %v410
    %v593 = vunpack.c.h.b16 %v410
    %v594 = vunpack.c.l.b16 %v411
    %v595 = vunpack.c.l.b16 %v412
    %v596 = vunpack.c.h.b16 %v412
    %v597 = vunpack.c.l.b16 %v413
    %v598 = vunpack.c.h.b16 %v413
    %v599 = vunpack.c.l.b16 %v414
    %v600 = vunpack.c.h.b16 %v414
    %v601 = vunpack.c.l.b16 %v415
    %v602 = vunpack.c.l.b16 %v416
    %v603 = vunpack.c.h.b16 %v416
    %v604 = vunpack.c.l.b16 %v417
    %v605 = vunpack.c.h.b16 %v417
    %v606 = vunpack.c.l.b16 %v418
    %v607 = vunpack.c.h.b16 %v418
    %v608 = vunpack.c.l.b16 %v419
    %v609 = vunpack.c.l.b16 %v420
    %v610 = vunpack.c.h.b16 %v420
    %v611 = vunpack.c.l.b16 %v421
    %v612 = vunpack.c.h.b16 %v421
    %v613 = vunpack.c.l.b16 %v422
    %v614 = vunpack.c.h.b16 %v422
    %v615 = vunpack.c.l.b16 %v423
    %v616 = vunpack.c.l.b16 %v424
    %v617 = vunpack.c.h.b16 %v424
    %v618 = vunpack.c.l.b16 %v425
    %v619 = vunpack.c.h.b16 %v425
    %v620 = vunpack.c.l.b16 %v426
    %v621 = vunpack.c.h.b16 %v426
    %v622 = vunpack.c.l.b16 %v427
    %v623 = vunpack.c.l.b16 %v428
    %v624 = vunpack.c.h.b16 %v428
    %v625 = vunpack.c.l.b16 %v429
    %v626 = vunpack.c.h.b16 %v429
    %v627 = vunpack.c.l.b16 %v430
    %v628 = vunpack.c.h.b16 %v430
    %v629 = vunpack.c.l.b16 %v431
    %v630 = vunpack.c.l.b16 %v432
    %v631 = vunpack.c.h.b16 %v432
    %v632 = vunpack.c.l.b16 %v433
    %v633 = vunpack.c.h.b16 %v433
    %v634 = vunpack.c.l.b16 %v434
    %v635 = vunpack.c.h.b16 %v434
    %v636 = vunpack.c.l.b16 %v435
    %v637 = vunpack.c.l.b16 %v436
    %v638 = vunpack.c.h.b16 %v436
    %v639 = vunpack.c.l.b16 %v437
    %v640 = vunpack.c.h.b16 %v437
    %v641 = vunpack.c.l.b16 %v438
    %v642 = vunpack.c.h.b16 %v438
    %v643 = vunpack.c.l.b16 %v439
    %v644 = vunpack.c.l.b16 %v440
    %v645 = vunpack.c.h.b16 %v440
    %v646 = vunpack.c.l.b16 %v441
    %v647 = vunpack.c.h.b16 %v441
    %v648 = vunpack.c.l.b16 %v442
    %v649 = vunpack.c.h.b16 %v442
    %v650 = vunpack.c.l.b16 %v443
    %v651 = vunpack.c.l.b16 %v444
    %v652 = vunpack.c.h.b16 %v444
    %v653 = vunpack.c.l.b16 %v445
    %v654 = vunpack.c.h.b16 %v445
    %v655 = vunpack.c.l.b16 %v446
    %v656 = vunpack.c.h.b16 %v446
    %v657 = vunpack.c.l.b16 %v447
    %v658 = vunpack.c.l.b16 %v448
    %v659 = vunpack.c.h.b16 %v448
    %v660 = vunpack.c.l.b16 %v449
    %v661 = vunpack.c.h.b16 %v449
    %v662 = vunpack.c.l.b16 %v450
    %v663 = vunpack.c.h.b16 %v450
    %v664 = vunpack.c.l.b16 %v451
    %v665 = vpack.c.b16 %v560, %v553
    %v666 = vpack.c.b16 %v561, %v554
    %v667 = vpack.c.b16 %v562, %v555
    %v668 = vpack.c.b16 %v563, %v556
    %v669 = vpack.c.b16 %v564, %v557
    %v670 = vpack.c.b16 %v565, %v558
    %v671 = vpack.c.b16 %v566, %v559
    %v672 = vpack.c.b16 %v574, %v567
    %v673 = vpack.c.b16 %v575, %v568
    %v674 = vpack.c.b16 %v576, %v569
    %v675 = vpack.c.b16 %v577, %v570
    %v676 = vpack.c.b16 %v578, %v571
    %v677 = vpack.c.b16 %v579, %v572
    %v678 = vpack.c.b16 %v580, %v573
    %v679 = vpack.c.b16 %v588, %v581
    %v680 = vpack.c.b16 %v589, %v582
    %v681 = vpack.c.b16 %v590, %v583
    %v682 = vpack.c.b16 %v591, %v584
    %v683 = vpack.c.b16 %v592, %v585
    %v684 = vpack.c.b16 %v593, %v586
    %v685 = vpack.c.b16 %v594, %v587
    %v686 = vpack.c.b16 %v602, %v595
    %v687 = vpack.c.b16 %v603, %v596
    %v688 = vpack.c.b16 %v604, %v597
    %v689 = vpack.c.b16 %v605, %v598
    %v690 = vpack.c.b16 %v606, %v599
    %v691 = vpack.c.b16 %v607, %v600
    %v692 = vpack.c.b16 %v608, %v601
    %v693 = vpack.c.b16 %v616, %v609
    %v694 = vpack.c.b16 %v617, %v610
    %v695 = vpack.c.b16 %v618, %v611
    %v696 = vpack.c.b16 %v619, %v612
    %v697 = vpack.c.b16 %v620, %v613
    %v698 = vpack.c.b16 %v621, %v614
    %v699 = vpack.c.b16 %v622, %v615
    %v700 = vpack.c.b16 %v630, %v623
    %v701 = vpack.c.b16 %v631, %v624
    %v702 = vpack.c.b16 %v632, %v625
    %v703 = vpack.c.b16 %v633, %v626
    %v704 = vpack.c.b16 %v634, %v627
    %v705 = vpack.c.b16 %v635, %v628
    %v706 = vpack.c.b16 %v636, %v629
    %v707 = vpack.c.b16 %v644, %v637
    %v708 = vpack.c.b16 %v645, %v638
    %v709 = vpack.c.b16 %v646, %v639
    %v710 = vpack.c.b16 %v647, %v640
    %v711 = vpack.c.b16 %v648, %v641
    %v712 = vpack.c.b16 %v649, %v642
    %v713 = vpack.c.b16 %v650, %v643
    %v714 = vpack.c.b16 %v658, %v651
    %v715 = vpack.c.b16 %v659, %v652
    %v716 = vpack.c.b16 %v660, %v653
    %v717 = vpack.c.b16 %v661, %v654
    %v718 = vpack.c.b16 %v662, %v655
    %v719 = vpack.c.b16 %v663, %v656
    %v720 = vpack.c.b16 %v664, %v657
    %777 = vmatprep.subr.bf16.mxu0 %v666
    %778 = vmatpush1.bf16.msra.mxu0 %v665
    %779 = vmatprep.subr.bf16.mxu0 %v673
    %780 = vmatpush1.bf16.msra.mxu0 %v672
    %781 = vmatprep.subr.bf16.mxu0 %v680
    %782 = vmatpush1.bf16.msra.mxu0 %v679
    %783 = vmatprep.subr.bf16.mxu0 %v687
    %784 = vmatpush1.bf16.msra.mxu0 %v686
    %785 = vmatprep.subr.bf16.mxu0 %v694
    %786 = vmatpush1.bf16.msra.mxu0 %v693
    %787 = vmatprep.subr.bf16.mxu0 %v701
    %788 = vmatpush1.bf16.msra.mxu0 %v700
    %789 = vmatprep.subr.bf16.mxu0 %v708
    %790 = vmatpush1.bf16.msra.mxu0 %v707
    %791 = vmatprep.subr.bf16.mxu0 %v715
    %792 = vmatpush1.bf16.msra.mxu0 %v714
    %793 = vmatprep.subr.bf16.mxu0 0
    %794 = vmatpush1.bf16.msra.mxu0 0
    %795 = vmatprep.subr.bf16.mxu0 0
    %796 = vmatpush1.bf16.msra.mxu0 0
    %797 = vmatprep.subr.bf16.mxu0 0
    %798 = vmatpush1.bf16.msra.mxu0 0
    %799 = vmatprep.subr.bf16.mxu0 0
    %800 = vmatpush1.bf16.msra.mxu0 0
    %801 = vmatprep.subr.bf16.mxu0 0
    %802 = vmatpush1.bf16.msra.mxu0 0
    %803 = vmatprep.subr.bf16.mxu0 0
    %804 = vmatpush1.bf16.msra.mxu0 0
    %805 = vmatprep.subr.bf16.mxu0 0
    %806 = vmatpush1.bf16.msra.mxu0 0
    %807 = vmatprep.subr.bf16.mxu0 0
    %808 = vmatpush1.bf16.msra.mxu0 0
    %809 = vmatprep.mubr.bf16.mxu0 0
    %810 = vmatmul.mubr.bf16.gmra.mrb[0].mxu0 %v384
    %v811 = vpop.f32.mrb[0].mxu0
    %v812 = vadd.f32 %v457, %v811
    %v813 = vpop.f32.mrb[0].mxu0
    %v814 = vadd.f32 %v461, %v813
    %v815 = vpop.f32.mrb[0].mxu0
    %v816 = vadd.f32 %v457, %v815
    %v817 = vpop.f32.mrb[0].mxu0
    %v818 = vadd.f32 %v461, %v817
    %819 = vmatprep.mubr.bf16.mxu0 0
    %820 = vmatmul.mubr.bf16.gmra.mrb[0].mxu0 %v385
    %v821 = vpop.f32.mrb[0].mxu0
    %v822 = vadd.f32 %v457, %v821
    %v823 = vpop.f32.mrb[0].mxu0
    %v824 = vadd.f32 %v461, %v823
    %v825 = vpop.f32.mrb[0].mxu0
    %v826 = vadd.f32 %v457, %v825
    %v827 = vpop.f32.mrb[0].mxu0
    %v828 = vadd.f32 %v461, %v827
    %829 = vmatprep.mubr.bf16.mxu0 0
    %830 = vmatmul.mubr.bf16.gmra.mrb[0].mxu0 %v386
    %v831 = vpop.f32.mrb[0].mxu0
    %v832 = vadd.f32 %v457, %v831
    %v833 = vpop.f32.mrb[0].mxu0
    %v834 = vadd.f32 %v461, %v833
    %v835 = vpop.f32.mrb[0].mxu0
    %v836 = vadd.f32 %v457, %v835
    %v837 = vpop.f32.mrb[0].mxu0
    %v838 = vadd.f32 %v461, %v837
    %839 = vmatprep.mubr.bf16.mxu0 0
    %840 = vmatmul.mubr.bf16.gmra.mrb[0].mxu0 %v387
    %v841 = vpop.f32.mrb[0].mxu0
    %v842 = vadd.f32 %v457, %v841
    %v843 = vpop.f32.mrb[0].mxu0
    %v844 = vadd.f32 %v461, %v843
    %v845 = vpop.f32.mrb[0].mxu0
    %v846 = vadd.f32 %v457, %v845
    %v847 = vpop.f32.mrb[0].mxu0
    %v848 = vadd.f32 %v461, %v847
    %849 = vdwg.mxu0
    %850 = vmatprep.subr.bf16.mxu0 %v668
    %851 = vmatpush1.bf16.msra.mxu0 %v667
    %852 = vmatprep.subr.bf16.mxu0 %v675
    %853 = vmatpush1.bf16.msra.mxu0 %v674
    %854 = vmatprep.subr.bf16.mxu0 %v682
    %855 = vmatpush1.bf16.msra.mxu0 %v681
    %856 = vmatprep.subr.bf16.mxu0 %v689
    %857 = vmatpush1.bf16.msra.mxu0 %v688
    %858 = vmatprep.subr.bf16.mxu0 %v696
    %859 = vmatpush1.bf16.msra.mxu0 %v695
    %860 = vmatprep.subr.bf16.mxu0 %v703
    %861 = vmatpush1.bf16.msra.mxu0 %v702
    %862 = vmatprep.subr.bf16.mxu0 %v710
    %863 = vmatpush1.bf16.msra.mxu0 %v709
    %864 = vmatprep.subr.bf16.mxu0 %v717
    %865 = vmatpush1.bf16.msra.mxu0 %v716
    %866 = vmatprep.subr.bf16.mxu0 0
    %867 = vmatpush1.bf16.msra.mxu0 0
    %868 = vmatprep.subr.bf16.mxu0 0
    %869 = vmatpush1.bf16.msra.mxu0 0
    %870 = vmatprep.subr.bf16.mxu0 0
    %871 = vmatpush1.bf16.msra.mxu0 0
    %872 = vmatprep.subr.bf16.mxu0 0
    %873 = vmatpush1.bf16.msra.mxu0 0
    %874 = vmatprep.subr.bf16.mxu0 0
    %875 = vmatpush1.bf16.msra.mxu0 0
    %876 = vmatprep.subr.bf16.mxu0 0
    %877 = vmatpush1.bf16.msra.mxu0 0
    %878 = vmatprep.subr.bf16.mxu0 0
    %879 = vmatpush1.bf16.msra.mxu0 0
    %880 = vmatprep.subr.bf16.mxu0 0
    %881 = vmatpush1.bf16.msra.mxu0 0
    %882 = vmatprep.mubr.bf16.mxu0 0
    %883 = vmatmul.mubr.bf16.gmra.mrb[0].mxu0 %v384
    %v884 = vpop.f32.mrb[0].mxu0
    %v885 = vadd.f32 %v465, %v884
    %v886 = vpop.f32.mrb[0].mxu0
    %v887 = vadd.f32 %v469, %v886
    %v888 = vpop.f32.mrb[0].mxu0
    %v889 = vadd.f32 %v465, %v888
    %v890 = vpop.f32.mrb[0].mxu0
    %v891 = vadd.f32 %v469, %v890
    %892 = vmatprep.mubr.bf16.mxu0 0
    %893 = vmatmul.mubr.bf16.gmra.mrb[0].mxu0 %v385
    %v894 = vpop.f32.mrb[0].mxu0
    %v895 = vadd.f32 %v465, %v894
    %v896 = vpop.f32.mrb[0].mxu0
    %v897 = vadd.f32 %v469, %v896
    %v898 = vpop.f32.mrb[0].mxu0
    %v899 = vadd.f32 %v465, %v898
    %v900 = vpop.f32.mrb[0].mxu0
    %v901 = vadd.f32 %v469, %v900
    %902 = vmatprep.mubr.bf16.mxu0 0
    %903 = vmatmul.mubr.bf16.gmra.mrb[0].mxu0 %v386
    %v904 = vpop.f32.mrb[0].mxu0
    %v905 = vadd.f32 %v465, %v904
    %v906 = vpop.f32.mrb[0].mxu0
    %v907 = vadd.f32 %v469, %v906
    %v908 = vpop.f32.mrb[0].mxu0
    %v909 = vadd.f32 %v465, %v908
    %v910 = vpop.f32.mrb[0].mxu0
    %v911 = vadd.f32 %v469, %v910
    %912 = vmatprep.mubr.bf16.mxu0 0
    %913 = vmatmul.mubr.bf16.gmra.mrb[0].mxu0 %v387
    %v914 = vpop.f32.mrb[0].mxu0
    %v915 = vadd.f32 %v465, %v914
    %v916 = vpop.f32.mrb[0].mxu0
    %v917 = vadd.f32 %v469, %v916
    %v918 = vpop.f32.mrb[0].mxu0
    %v919 = vadd.f32 %v465, %v918
    %v920 = vpop.f32.mrb[0].mxu0
    %v921 = vadd.f32 %v469, %v920
    %922 = vdwg.mxu0
    %923 = vmatprep.subr.bf16.mxu0 %v670
    %924 = vmatpush1.bf16.msra.mxu0 %v669
    %925 = vmatprep.subr.bf16.mxu0 %v677
    %926 = vmatpush1.bf16.msra.mxu0 %v676
    %927 = vmatprep.subr.bf16.mxu0 %v684
    %928 = vmatpush1.bf16.msra.mxu0 %v683
    %929 = vmatprep.subr.bf16.mxu0 %v691
    %930 = vmatpush1.bf16.msra.mxu0 %v690
    %931 = vmatprep.subr.bf16.mxu0 %v698
    %932 = vmatpush1.bf16.msra.mxu0 %v697
    %933 = vmatprep.subr.bf16.mxu0 %v705
    %934 = vmatpush1.bf16.msra.mxu0 %v704
    %935 = vmatprep.subr.bf16.mxu0 %v712
    %936 = vmatpush1.bf16.msra.mxu0 %v711
    %937 = vmatprep.subr.bf16.mxu0 %v719
    %938 = vmatpush1.bf16.msra.mxu0 %v718
    %939 = vmatprep.subr.bf16.mxu0 0
    %940 = vmatpush1.bf16.msra.mxu0 0
    %941 = vmatprep.subr.bf16.mxu0 0
    %942 = vmatpush1.bf16.msra.mxu0 0
    %943 = vmatprep.subr.bf16.mxu0 0
    %944 = vmatpush1.bf16.msra.mxu0 0
    %945 = vmatprep.subr.bf16.mxu0 0
    %946 = vmatpush1.bf16.msra.mxu0 0
    %947 = vmatprep.subr.bf16.mxu0 0
    %948 = vmatpush1.bf16.msra.mxu0 0
    %949 = vmatprep.subr.bf16.mxu0 0
    %950 = vmatpush1.bf16.msra.mxu0 0
    %951 = vmatprep.subr.bf16.mxu0 0
    %952 = vmatpush1.bf16.msra.mxu0 0
    %953 = vmatprep.subr.bf16.mxu0 0
    %954 = vmatpush1.bf16.msra.mxu0 0
    %955 = vmatprep.mubr.bf16.mxu0 0
    %956 = vmatmul.mubr.bf16.gmra.mrb[0].mxu0 %v384
    %v957 = vpop.f32.mrb[0].mxu0
    %v958 = vadd.f32 %v473, %v957
    %v959 = vpop.f32.mrb[0].mxu0
    %v960 = vadd.f32 %v477, %v959
    %v961 = vpop.f32.mrb[0].mxu0
    %v962 = vadd.f32 %v473, %v961
    %v963 = vpop.f32.mrb[0].mxu0
    %v964 = vadd.f32 %v477, %v963
    %965 = vmatprep.mubr.bf16.mxu0 0
    %966 = vmatmul.mubr.bf16.gmra.mrb[0].mxu0 %v385
    %v967 = vpop.f32.mrb[0].mxu0
    %v968 = vadd.f32 %v473, %v967
    %v969 = vpop.f32.mrb[0].mxu0
    %v970 = vadd.f32 %v477, %v969
    %v971 = vpop.f32.mrb[0].mxu0
    %v972 = vadd.f32 %v473, %v971
    %v973 = vpop.f32.mrb[0].mxu0
    %v974 = vadd.f32 %v477, %v973
    %975 = vmatprep.mubr.bf16.mxu0 0
    %976 = vmatmul.mubr.bf16.gmra.mrb[0].mxu0 %v386
    %v977 = vpop.f32.mrb[0].mxu0
    %v978 = vadd.f32 %v473, %v977
    %v979 = vpop.f32.mrb[0].mxu0
    %v980 = vadd.f32 %v477, %v979
    %v981 = vpop.f32.mrb[0].mxu0
    %v982 = vadd.f32 %v473, %v981
    %v983 = vpop.f32.mrb[0].mxu0
    %v984 = vadd.f32 %v477, %v983
    %985 = vmatprep.mubr.bf16.mxu0 0
    %986 = vmatmul.mubr.bf16.gmra.mrb[0].mxu0 %v387
    %v987 = vpop.f32.mrb[0].mxu0
    %v988 = vadd.f32 %v473, %v987
    %v989 = vpop.f32.mrb[0].mxu0
    %v990 = vadd.f32 %v477, %v989
    %v991 = vpop.f32.mrb[0].mxu0
    %v992 = vadd.f32 %v473, %v991
    %v993 = vpop.f32.mrb[0].mxu0
    %v994 = vadd.f32 %v477, %v993
    %995 = vdwg.mxu0
    %996 = vmatprep.subr.bf16.mxu0 0
    %997 = vmatpush1.bf16.msra.mxu0 %v671
    %998 = vmatprep.subr.bf16.mxu0 0
    %999 = vmatpush1.bf16.msra.mxu0 %v678
    %1000 = vmatprep.subr.bf16.mxu0 0
    %1001 = vmatpush1.bf16.msra.mxu0 %v685
    %1002 = vmatprep.subr.bf16.mxu0 0
    %1003 = vmatpush1.bf16.msra.mxu0 %v692
    %1004 = vmatprep.subr.bf16.mxu0 0
    %1005 = vmatpush1.bf16.msra.mxu0 %v699
    %1006 = vmatprep.subr.bf16.mxu0 0
    %1007 = vmatpush1.bf16.msra.mxu0 %v706
    %1008 = vmatprep.subr.bf16.mxu0 0
    %1009 = vmatpush1.bf16.msra.mxu0 %v713
    %1010 = vmatprep.subr.bf16.mxu0 0
    %1011 = vmatpush1.bf16.msra.mxu0 %v720
    %1012 = vmatprep.subr.bf16.mxu0 0
    %1013 = vmatpush1.bf16.msra.mxu0 0
    %1014 = vmatprep.subr.bf16.mxu0 0
    %1015 = vmatpush1.bf16.msra.mxu0 0
    %1016 = vmatprep.subr.bf16.mxu0 0
    %1017 = vmatpush1.bf16.msra.mxu0 0
    %1018 = vmatprep.subr.bf16.mxu0 0
    %1019 = vmatpush1.bf16.msra.mxu0 0
    %1020 = vmatprep.subr.bf16.mxu0 0
    %1021 = vmatpush1.bf16.msra.mxu0 0
    %1022 = vmatprep.subr.bf16.mxu0 0
    %1023 = vmatpush1.bf16.msra.mxu0 0
    %1024 = vmatprep.subr.bf16.mxu0 0
    %1025 = vmatpush1.bf16.msra.mxu0 0
    %1026 = vmatprep.subr.bf16.mxu0 0
    %1027 = vmatpush1.bf16.msra.mxu0 0
    %1028 = vmatprep.mubr.bf16.mxu0 0
    %1029 = vmatmul.mubr.bf16.gmra.mrb[0].mxu0 %v384
    %v1030 = vpop.f32.mrb[0].mxu0
    %v1031 = vadd.f32 %v481, %v1030
    %v1032 = vpop.f32.mrb[0].mxu0
    %v1033 = vpop.f32.mrb[0].mxu0
    %v1034 = vadd.f32 %v481, %v1033
    %v1035 = vpop.f32.mrb[0].mxu0
    %1036 = vmatprep.mubr.bf16.mxu0 0
    %1037 = vmatmul.mubr.bf16.gmra.mrb[0].mxu0 %v385
    %v1038 = vpop.f32.mrb[0].mxu0
    %v1039 = vadd.f32 %v481, %v1038
    %v1040 = vpop.f32.mrb[0].mxu0
    %v1041 = vpop.f32.mrb[0].mxu0
    %v1042 = vadd.f32 %v481, %v1041
    %v1043 = vpop.f32.mrb[0].mxu0
    %1044 = vmatprep.mubr.bf16.mxu0 0
    %1045 = vmatmul.mubr.bf16.gmra.mrb[0].mxu0 %v386
    %v1046 = vpop.f32.mrb[0].mxu0
    %v1047 = vadd.f32 %v481, %v1046
    %v1048 = vpop.f32.mrb[0].mxu0
    %v1049 = vpop.f32.mrb[0].mxu0
    %v1050 = vadd.f32 %v481, %v1049
    %v1051 = vpop.f32.mrb[0].mxu0
    %1052 = vmatprep.mubr.bf16.mxu0 0
    %1053 = vmatmul.mubr.bf16.gmra.mrb[0].mxu0 %v387
    %v1054 = vpop.f32.mrb[0].mxu0
    %v1055 = vadd.f32 %v481, %v1054
    %v1056 = vpop.f32.mrb[0].mxu0
    %v1057 = vpop.f32.mrb[0].mxu0
    %v1058 = vadd.f32 %v481, %v1057
    %v1059 = vpop.f32.mrb[0].mxu0
    %1060 = vdwg.mxu0
    %v1061 = vsub.f32 0.0, %v812
    %v1062 = vsub.f32 0.0, %v814
    %v1063 = vsub.f32 0.0, %v885
    %v1064 = vsub.f32 0.0, %v887
    %v1065 = vsub.f32 0.0, %v958
    %v1066 = vsub.f32 0.0, %v960
    %v1067 = vsub.f32 0.0, %v1031
    %v1068 = vsub.f32 0.0, %v816
    %v1069 = vsub.f32 0.0, %v818
    %v1070 = vsub.f32 0.0, %v889
    %v1071 = vsub.f32 0.0, %v891
    %v1072 = vsub.f32 0.0, %v962
    %v1073 = vsub.f32 0.0, %v964
    %v1074 = vsub.f32 0.0, %v1034
    %v1075 = vsub.f32 0.0, %v822
    %v1076 = vsub.f32 0.0, %v824
    %v1077 = vsub.f32 0.0, %v895
    %v1078 = vsub.f32 0.0, %v897
    %v1079 = vsub.f32 0.0, %v968
    %v1080 = vsub.f32 0.0, %v970
    %v1081 = vsub.f32 0.0, %v1039
    %v1082 = vsub.f32 0.0, %v826
    %v1083 = vsub.f32 0.0, %v828
    %v1084 = vsub.f32 0.0, %v899
    %v1085 = vsub.f32 0.0, %v901
    %v1086 = vsub.f32 0.0, %v972
    %v1087 = vsub.f32 0.0, %v974
    %v1088 = vsub.f32 0.0, %v1042
    %v1089 = vsub.f32 0.0, %v832
    %v1090 = vsub.f32 0.0, %v834
    %v1091 = vsub.f32 0.0, %v905
    %v1092 = vsub.f32 0.0, %v907
    %v1093 = vsub.f32 0.0, %v978
    %v1094 = vsub.f32 0.0, %v980
    %v1095 = vsub.f32 0.0, %v1047
    %v1096 = vsub.f32 0.0, %v836
    %v1097 = vsub.f32 0.0, %v838
    %v1098 = vsub.f32 0.0, %v909
    %v1099 = vsub.f32 0.0, %v911
    %v1100 = vsub.f32 0.0, %v982
    %v1101 = vsub.f32 0.0, %v984
    %v1102 = vsub.f32 0.0, %v1050
    %v1103 = vsub.f32 0.0, %v842
    %v1104 = vsub.f32 0.0, %v844
    %v1105 = vsub.f32 0.0, %v915
    %v1106 = vsub.f32 0.0, %v917
    %v1107 = vsub.f32 0.0, %v988
    %v1108 = vsub.f32 0.0, %v990
    %v1109 = vsub.f32 0.0, %v1055
    %v1110 = vsub.f32 0.0, %v846
    %v1111 = vsub.f32 0.0, %v848
    %v1112 = vsub.f32 0.0, %v919
    %v1113 = vsub.f32 0.0, %v921
    %v1114 = vsub.f32 0.0, %v992
    %v1115 = vsub.f32 0.0, %v994
    %v1116 = vsub.f32 0.0, %v1058
    %v1117 = vmul.f32 %v1061, 1.442695
    %v1118 = vpow.pop %v1117
    %v1119 = vmul.f32 %v1062, 1.442695
    %v1120 = vpow.pop %v1119
    %v1121 = vmul.f32 %v1063, 1.442695
    %v1122 = vpow.pop %v1121
    %v1123 = vmul.f32 %v1064, 1.442695
    %v1124 = vpow.pop %v1123
    %v1125 = vmul.f32 %v1065, 1.442695
    %v1126 = vpow.pop %v1125
    %v1127 = vmul.f32 %v1066, 1.442695
    %v1128 = vpow.pop %v1127
    %v1129 = vmul.f32 %v1067, 1.442695
    %v1130 = vpow.pop %v1129
    %v1131 = vmul.f32 %v1068, 1.442695
    %v1132 = vpow.pop %v1131
    %v1133 = vmul.f32 %v1069, 1.442695
    %v1134 = vpow.pop %v1133
    %v1135 = vmul.f32 %v1070, 1.442695
    %v1136 = vpow.pop %v1135
    %v1137 = vmul.f32 %v1071, 1.442695
    %v1138 = vpow.pop %v1137
    %v1139 = vmul.f32 %v1072, 1.442695
    %v1140 = vpow.pop %v1139
    %v1141 = vmul.f32 %v1073, 1.442695
    %v1142 = vpow.pop %v1141
    %v1143 = vmul.f32 %v1074, 1.442695
    %v1144 = vpow.pop %v1143
    %v1145 = vmul.f32 %v1075, 1.442695
    %v1146 = vpow.pop %v1145
    %v1147 = vmul.f32 %v1076, 1.442695
    %v1148 = vpow.pop %v1147
    %v1149 = vmul.f32 %v1077, 1.442695
    %v1150 = vpow.pop %v1149
    %v1151 = vmul.f32 %v1078, 1.442695
    %v1152 = vpow.pop %v1151
    %v1153 = vmul.f32 %v1079, 1.442695
    %v1154 = vpow.pop %v1153
    %v1155 = vmul.f32 %v1080, 1.442695
    %v1156 = vpow.pop %v1155
    %v1157 = vmul.f32 %v1081, 1.442695
    %v1158 = vpow.pop %v1157
    %v1159 = vmul.f32 %v1082, 1.442695
    %v1160 = vpow.pop %v1159
    %v1161 = vmul.f32 %v1083, 1.442695
    %v1162 = vpow.pop %v1161
    %v1163 = vmul.f32 %v1084, 1.442695
    %v1164 = vpow.pop %v1163
    %v1165 = vmul.f32 %v1085, 1.442695
    %v1166 = vpow.pop %v1165
    %v1167 = vmul.f32 %v1086, 1.442695
    %v1168 = vpow.pop %v1167
    %v1169 = vmul.f32 %v1087, 1.442695
    %v1170 = vpow.pop %v1169
    %v1171 = vmul.f32 %v1088, 1.442695
    %v1172 = vpow.pop %v1171
    %v1173 = vmul.f32 %v1089, 1.442695
    %v1174 = vpow.pop %v1173
    %v1175 = vmul.f32 %v1090, 1.442695
    %v1176 = vpow.pop %v1175
    %v1177 = vmul.f32 %v1091, 1.442695
    %v1178 = vpow.pop %v1177
    %v1179 = vmul.f32 %v1092, 1.442695
    %v1180 = vpow.pop %v1179
    %v1181 = vmul.f32 %v1093, 1.442695
    %v1182 = vpow.pop %v1181
    %v1183 = vmul.f32 %v1094, 1.442695
    %v1184 = vpow.pop %v1183
    %v1185 = vmul.f32 %v1095, 1.442695
    %v1186 = vpow.pop %v1185
    %v1187 = vmul.f32 %v1096, 1.442695
    %v1188 = vpow.pop %v1187
    %v1189 = vmul.f32 %v1097, 1.442695
    %v1190 = vpow.pop %v1189
    %v1191 = vmul.f32 %v1098, 1.442695
    %v1192 = vpow.pop %v1191
    %v1193 = vmul.f32 %v1099, 1.442695
    %v1194 = vpow.pop %v1193
    %v1195 = vmul.f32 %v1100, 1.442695
    %v1196 = vpow.pop %v1195
    %v1197 = vmul.f32 %v1101, 1.442695
    %v1198 = vpow.pop %v1197
    %v1199 = vmul.f32 %v1102, 1.442695
    %v1200 = vpow.pop %v1199
    %v1201 = vmul.f32 %v1103, 1.442695
    %v1202 = vpow.pop %v1201
    %v1203 = vmul.f32 %v1104, 1.442695
    %v1204 = vpow.pop %v1203
    %v1205 = vmul.f32 %v1105, 1.442695
    %v1206 = vpow.pop %v1205
    %v1207 = vmul.f32 %v1106, 1.442695
    %v1208 = vpow.pop %v1207
    %v1209 = vmul.f32 %v1107, 1.442695
    %v1210 = vpow.pop %v1209
    %v1211 = vmul.f32 %v1108, 1.442695
    %v1212 = vpow.pop %v1211
    %v1213 = vmul.f32 %v1109, 1.442695
    %v1214 = vpow.pop %v1213
    %v1215 = vmul.f32 %v1110, 1.442695
    %v1216 = vpow.pop %v1215
    %v1217 = vmul.f32 %v1111, 1.442695
    %v1218 = vpow.pop %v1217
    %v1219 = vmul.f32 %v1112, 1.442695
    %v1220 = vpow.pop %v1219
    %v1221 = vmul.f32 %v1113, 1.442695
    %v1222 = vpow.pop %v1221
    %v1223 = vmul.f32 %v1114, 1.442695
    %v1224 = vpow.pop %v1223
    %v1225 = vmul.f32 %v1115, 1.442695
    %v1226 = vpow.pop %v1225
    %v1227 = vmul.f32 %v1116, 1.442695
    %v1228 = vpow.pop %v1227
    %v1229 = vadd.f32 %v1118, 1.0
    %v1230 = vadd.f32 %v1120, 1.0
    %v1231 = vadd.f32 %v1122, 1.0
    %v1232 = vadd.f32 %v1124, 1.0
    %v1233 = vadd.f32 %v1126, 1.0
    %v1234 = vadd.f32 %v1128, 1.0
    %v1235 = vadd.f32 %v1130, 1.0
    %v1236 = vadd.f32 %v1132, 1.0
    %v1237 = vadd.f32 %v1134, 1.0
    %v1238 = vadd.f32 %v1136, 1.0
    %v1239 = vadd.f32 %v1138, 1.0
    %v1240 = vadd.f32 %v1140, 1.0
    %v1241 = vadd.f32 %v1142, 1.0
    %v1242 = vadd.f32 %v1144, 1.0
    %v1243 = vadd.f32 %v1146, 1.0
    %v1244 = vadd.f32 %v1148, 1.0
    %v1245 = vadd.f32 %v1150, 1.0
    %v1246 = vadd.f32 %v1152, 1.0
    %v1247 = vadd.f32 %v1154, 1.0
    %v1248 = vadd.f32 %v1156, 1.0
    %v1249 = vadd.f32 %v1158, 1.0
    %v1250 = vadd.f32 %v1160, 1.0
    %v1251 = vadd.f32 %v1162, 1.0
    %v1252 = vadd.f32 %v1164, 1.0
    %v1253 = vadd.f32 %v1166, 1.0
    %v1254 = vadd.f32 %v1168, 1.0
    %v1255 = vadd.f32 %v1170, 1.0
    %v1256 = vadd.f32 %v1172, 1.0
    %v1257 = vadd.f32 %v1174, 1.0
    %v1258 = vadd.f32 %v1176, 1.0
    %v1259 = vadd.f32 %v1178, 1.0
    %v1260 = vadd.f32 %v1180, 1.0
    %v1261 = vadd.f32 %v1182, 1.0
    %v1262 = vadd.f32 %v1184, 1.0
    %v1263 = vadd.f32 %v1186, 1.0
    %v1264 = vadd.f32 %v1188, 1.0
    %v1265 = vadd.f32 %v1190, 1.0
    %v1266 = vadd.f32 %v1192, 1.0
    %v1267 = vadd.f32 %v1194, 1.0
    %v1268 = vadd.f32 %v1196, 1.0
    %v1269 = vadd.f32 %v1198, 1.0
    %v1270 = vadd.f32 %v1200, 1.0
    %v1271 = vadd.f32 %v1202, 1.0
    %v1272 = vadd.f32 %v1204, 1.0
    %v1273 = vadd.f32 %v1206, 1.0
    %v1274 = vadd.f32 %v1208, 1.0
    %v1275 = vadd.f32 %v1210, 1.0
    %v1276 = vadd.f32 %v1212, 1.0
    %v1277 = vadd.f32 %v1214, 1.0
    %v1278 = vadd.f32 %v1216, 1.0
    %v1279 = vadd.f32 %v1218, 1.0
    %v1280 = vadd.f32 %v1220, 1.0
    %v1281 = vadd.f32 %v1222, 1.0
    %v1282 = vadd.f32 %v1224, 1.0
    %v1283 = vadd.f32 %v1226, 1.0
    %v1284 = vadd.f32 %v1228, 1.0
    %v1285 = vrcp.pop %v1229
    %v1286 = vrcp.pop %v1230
    %v1287 = vrcp.pop %v1231
    %v1288 = vrcp.pop %v1232
    %v1289 = vrcp.pop %v1233
    %v1290 = vrcp.pop %v1234
    %v1291 = vrcp.pop %v1235
    %v1292 = vrcp.pop %v1236
    %v1293 = vrcp.pop %v1237
    %v1294 = vrcp.pop %v1238
    %v1295 = vrcp.pop %v1239
    %v1296 = vrcp.pop %v1240
    %v1297 = vrcp.pop %v1241
    %v1298 = vrcp.pop %v1242
    %v1299 = vrcp.pop %v1243
    %v1300 = vrcp.pop %v1244
    %v1301 = vrcp.pop %v1245
    %v1302 = vrcp.pop %v1246
    %v1303 = vrcp.pop %v1247
    %v1304 = vrcp.pop %v1248
    %v1305 = vrcp.pop %v1249
    %v1306 = vrcp.pop %v1250
    %v1307 = vrcp.pop %v1251
    %v1308 = vrcp.pop %v1252
    %v1309 = vrcp.pop %v1253
    %v1310 = vrcp.pop %v1254
    %v1311 = vrcp.pop %v1255
    %v1312 = vrcp.pop %v1256
    %v1313 = vrcp.pop %v1257
    %v1314 = vrcp.pop %v1258
    %v1315 = vrcp.pop %v1259
    %v1316 = vrcp.pop %v1260
    %v1317 = vrcp.pop %v1261
    %v1318 = vrcp.pop %v1262
    %v1319 = vrcp.pop %v1263
    %v1320 = vrcp.pop %v1264
    %v1321 = vrcp.pop %v1265
    %v1322 = vrcp.pop %v1266
    %v1323 = vrcp.pop %v1267
    %v1324 = vrcp.pop %v1268
    %v1325 = vrcp.pop %v1269
    %v1326 = vrcp.pop %v1270
    %v1327 = vrcp.pop %v1271
    %v1328 = vrcp.pop %v1272
    %v1329 = vrcp.pop %v1273
    %v1330 = vrcp.pop %v1274
    %v1331 = vrcp.pop %v1275
    %v1332 = vrcp.pop %v1276
    %v1333 = vrcp.pop %v1277
    %v1334 = vrcp.pop %v1278
    %v1335 = vrcp.pop %v1279
    %v1336 = vrcp.pop %v1280
    %v1337 = vrcp.pop %v1281
    %v1338 = vrcp.pop %v1282
    %v1339 = vrcp.pop %v1283
    %v1340 = vrcp.pop %v1284
    %v1341 = vpack.c.bf16 %v1292, %v1285
    %v1342 = vpack.c.bf16 %v1293, %v1286
    %v1343 = vpack.c.bf16 %v1294, %v1287
    %v1344 = vpack.c.bf16 %v1295, %v1288
    %v1345 = vpack.c.bf16 %v1296, %v1289
    %v1346 = vpack.c.bf16 %v1297, %v1290
    %v1347 = vpack.c.bf16 %v1298, %v1291
    %v1348 = vpack.c.bf16 %v1306, %v1299
    %v1349 = vpack.c.bf16 %v1307, %v1300
    %v1350 = vpack.c.bf16 %v1308, %v1301
    %v1351 = vpack.c.bf16 %v1309, %v1302
    %v1352 = vpack.c.bf16 %v1310, %v1303
    %v1353 = vpack.c.bf16 %v1311, %v1304
    %v1354 = vpack.c.bf16 %v1312, %v1305
    %v1355 = vpack.c.bf16 %v1320, %v1313
    %v1356 = vpack.c.bf16 %v1321, %v1314
    %v1357 = vpack.c.bf16 %v1322, %v1315
    %v1358 = vpack.c.bf16 %v1323, %v1316
    %v1359 = vpack.c.bf16 %v1324, %v1317
    %v1360 = vpack.c.bf16 %v1325, %v1318
    %v1361 = vpack.c.bf16 %v1326, %v1319
    %v1362 = vpack.c.bf16 %v1334, %v1327
    %v1363 = vpack.c.bf16 %v1335, %v1328
    %v1364 = vpack.c.bf16 %v1336, %v1329
    %v1365 = vpack.c.bf16 %v1337, %v1330
    %v1366 = vpack.c.bf16 %v1338, %v1331
    %v1367 = vpack.c.bf16 %v1339, %v1332
    %v1368 = vpack.c.bf16 %v1340, %v1333
    %v1397 = vunpack.c.l.b16 %v1341
    %v1398 = vunpack.c.l.b16 %v1342
    %v1399 = vunpack.c.l.b16 %v1343
    %v1400 = vunpack.c.l.b16 %v1344
    %v1401 = vunpack.c.l.b16 %v1345
    %v1402 = vunpack.c.l.b16 %v1346
    %v1403 = vunpack.c.l.b16 %v1347
    %v1404 = vunpack.c.h.b16 %v1341
    %v1405 = vunpack.c.h.b16 %v1342
    %v1406 = vunpack.c.h.b16 %v1343
    %v1407 = vunpack.c.h.b16 %v1344
    %v1408 = vunpack.c.h.b16 %v1345
    %v1409 = vunpack.c.h.b16 %v1346
    %v1410 = vunpack.c.h.b16 %v1347
    %v1411 = vunpack.c.l.b16 %v1348
    %v1412 = vunpack.c.l.b16 %v1349
    %v1413 = vunpack.c.l.b16 %v1350
    %v1414 = vunpack.c.l.b16 %v1351
    %v1415 = vunpack.c.l.b16 %v1352
    %v1416 = vunpack.c.l.b16 %v1353
    %v1417 = vunpack.c.l.b16 %v1354
    %v1418 = vunpack.c.h.b16 %v1348
    %v1419 = vunpack.c.h.b16 %v1349
    %v1420 = vunpack.c.h.b16 %v1350
    %v1421 = vunpack.c.h.b16 %v1351
    %v1422 = vunpack.c.h.b16 %v1352
    %v1423 = vunpack.c.h.b16 %v1353
    %v1424 = vunpack.c.h.b16 %v1354
    %v1425 = vunpack.c.l.b16 %v1355
    %v1426 = vunpack.c.l.b16 %v1356
    %v1427 = vunpack.c.l.b16 %v1357
    %v1428 = vunpack.c.l.b16 %v1358
    %v1429 = vunpack.c.l.b16 %v1359
    %v1430 = vunpack.c.l.b16 %v1360
    %v1431 = vunpack.c.l.b16 %v1361
    %v1432 = vunpack.c.h.b16 %v1355
    %v1433 = vunpack.c.h.b16 %v1356
    %v1434 = vunpack.c.h.b16 %v1357
    %v1435 = vunpack.c.h.b16 %v1358
    %v1436 = vunpack.c.h.b16 %v1359
    %v1437 = vunpack.c.h.b16 %v1360
    %v1438 = vunpack.c.h.b16 %v1361
    %v1439 = vunpack.c.l.b16 %v1362
    %v1440 = vunpack.c.l.b16 %v1363
    %v1441 = vunpack.c.l.b16 %v1364
    %v1442 = vunpack.c.l.b16 %v1365
    %v1443 = vunpack.c.l.b16 %v1366
    %v1444 = vunpack.c.l.b16 %v1367
    %v1445 = vunpack.c.l.b16 %v1368
    %v1446 = vunpack.c.h.b16 %v1362
    %v1447 = vunpack.c.h.b16 %v1363
    %v1448 = vunpack.c.h.b16 %v1364
    %v1449 = vunpack.c.h.b16 %v1365
    %v1450 = vunpack.c.h.b16 %v1366
    %v1451 = vunpack.c.h.b16 %v1367
    %v1452 = vunpack.c.h.b16 %v1368
    %v1453 = vpack.c.b16 %v1398, %v1397
    %v1454 = vpack.c.b16 %v1400, %v1399
    %v1455 = vpack.c.b16 %v1402, %v1401
    %v1456 = vpack.c.b16 %v1403, %v1403
    %v1457 = vpack.c.b16 %v1405, %v1404
    %v1458 = vpack.c.b16 %v1407, %v1406
    %v1459 = vpack.c.b16 %v1409, %v1408
    %v1460 = vpack.c.b16 %v1410, %v1410
    %v1461 = vpack.c.b16 %v1412, %v1411
    %v1462 = vpack.c.b16 %v1414, %v1413
    %v1463 = vpack.c.b16 %v1416, %v1415
    %v1464 = vpack.c.b16 %v1417, %v1417
    %v1465 = vpack.c.b16 %v1419, %v1418
    %v1466 = vpack.c.b16 %v1421, %v1420
    %v1467 = vpack.c.b16 %v1423, %v1422
    %v1468 = vpack.c.b16 %v1424, %v1424
    %v1469 = vpack.c.b16 %v1426, %v1425
    %v1470 = vpack.c.b16 %v1428, %v1427
    %v1471 = vpack.c.b16 %v1430, %v1429
    %v1472 = vpack.c.b16 %v1431, %v1431
    %v1473 = vpack.c.b16 %v1433, %v1432
    %v1474 = vpack.c.b16 %v1435, %v1434
    %v1475 = vpack.c.b16 %v1437, %v1436
    %v1476 = vpack.c.b16 %v1438, %v1438
    %v1477 = vpack.c.b16 %v1440, %v1439
    %v1478 = vpack.c.b16 %v1442, %v1441
    %v1479 = vpack.c.b16 %v1444, %v1443
    %v1480 = vpack.c.b16 %v1445, %v1445
    %v1481 = vpack.c.b16 %v1447, %v1446
    %v1482 = vpack.c.b16 %v1449, %v1448
    %v1483 = vpack.c.b16 %v1451, %v1450
    %v1484 = vpack.c.b16 %v1452, %v1452
    %1517 = vst [vmem:[#allocation10] sm:$0xff] %v1453
    %1518 = vst [vmem:[#allocation10 + $0x8] sm:$0xff] %v1454
    %1519 = vst [vmem:[#allocation10 + $0x10] sm:$0xff] %v1455
    %1520 = vst [vmem:[#allocation10 + $0x18] sm:$0xf] %v1456
    %1521 = vst [vmem:[#allocation10 + $0x1c] sm:$0xff] %v1457
    %1522 = vst [vmem:[#allocation10 + $0x24] sm:$0xff] %v1458
    %1523 = vst [vmem:[#allocation10 + $0x2c] sm:$0xff] %v1459
    %1524 = vst [vmem:[#allocation10 + $0x34] sm:$0xf] %v1460
    %1525 = vst [vmem:[#allocation10 + $0x38] sm:$0xff] %v1461
    %1526 = vst [vmem:[#allocation10 + $0x40] sm:$0xff] %v1462
    %1527 = vst [vmem:[#allocation10 + $0x48] sm:$0xff] %v1463
    %1528 = vst [vmem:[#allocation10 + $0x50] sm:$0xf] %v1464
    %1529 = vst [vmem:[#allocation10 + $0x54] sm:$0xff] %v1465
    %1530 = vst [vmem:[#allocation10 + $0x5c] sm:$0xff] %v1466
    %1531 = vst [vmem:[#allocation10 + $0x64] sm:$0xff] %v1467
    %1532 = vst [vmem:[#allocation10 + $0x6c] sm:$0xf] %v1468
    %1533 = vst [vmem:[#allocation10 + $0x70] sm:$0xff] %v1469
    %1534 = vst [vmem:[#allocation10 + $0x78] sm:$0xff] %v1470
    %1535 = vst [vmem:[#allocation10 + $0x80] sm:$0xff] %v1471
    %1536 = vst [vmem:[#allocation10 + $0x88] sm:$0xf] %v1472
    %1537 = vst [vmem:[#allocation10 + $0x8c] sm:$0xff] %v1473
    %1538 = vst [vmem:[#allocation10 + $0x94] sm:$0xff] %v1474
    %1539 = vst [vmem:[#allocation10 + $0x9c] sm:$0xff] %v1475
    %1540 = vst [vmem:[#allocation10 + $0xa4] sm:$0xf] %v1476
    %1541 = vst [vmem:[#allocation10 + $0xa8] sm:$0xff] %v1477
    %1542 = vst [vmem:[#allocation10 + $0xb0] sm:$0xff] %v1478
    %1543 = vst [vmem:[#allocation10 + $0xb8] sm:$0xff] %v1479
    %1544 = vst [vmem:[#allocation10 + $0xc0] sm:$0xf] %v1480
    %1545 = vst [vmem:[#allocation10 + $0xc4] sm:$0xff] %v1481
    %1546 = vst [vmem:[#allocation10 + $0xcc] sm:$0xff] %v1482
    %1547 = vst [vmem:[#allocation10 + $0xd4] sm:$0xff] %v1483
    %1548 = vst [vmem:[#allocation10 + $0xdc] sm:$0xf] %v1484
    // Predicated region
    $region46: #{tpu_custom_call.1} parent=1 // pred_check
      _
    $region47: #{tpu_custom_call.1} parent=1 // pred_check_branch
      %1550 = sbr.rel (0) target = $region49
    $region48: #{tpu_custom_call.1} parent=1 // pred_region
      %s1552 = ssub.s32 3584, 3584
      %1553 = vsyncadd [#allocation4], %s1552
      %s1554 = sshll.u32 [#allocation10], 4
      %s1555 = int_to_ptr.vmem [resolvable:$true] %s1554
      %1560 = dma.vmem_to_hbm [thread:$0]  %s1555, 3584, %s7, [#allocation4], 448, 448, 28
    $region49: #{tpu_custom_call.1} parent=1 // pred_fallthru
      _
    // Predicated region
    $region50: #{tpu_custom_call.1} parent=1 // pred_check
      _
    $region51: #{tpu_custom_call.1} parent=1 // pred_check_branch
      %1562 = sbr.rel (0) target = $region53
    $region52: #{tpu_custom_call.1} parent=1 // pred_region
      %1563 = dma.done [#allocation4], 3584
    $region53: #{tpu_custom_call.1} parent=1 // pred_fallthru
      _
    %1564 = vsyncpa [#allocation3], 1
    %1565 = vsyncpa [#allocation6], 1
    %1566 = vsyncpa [#allocation9], 1
    %1567 = vsyncpa [#allocation4], 1

</llo_original>
